<compile_context>
chip_gen: v7x
topology: tpu7x:2x2x1
jax: 0.10.0
libtpu: 0.0.40
codegen_flags: <defaults>
</compile_context>

<pallas_src>
import jax
import jax.numpy as jnp
from jax.experimental import pallas as pl
from jax.experimental.pallas import tpu as pltpu


def lstm_kernel(x_ref, wx_ref, wh_ref, b_ref, scl_ref, off_ref, wph_ref, bp_ref,
                out_ref):
    # x_ref:   (B, T)     raw scalar inputs (input_dim == 1, degenerate dim dropped)
    # wx_ref:  (1, 4H)    fused x-projection weights [g|i|f|o], i/f/o cols pre-scaled 0.5
    # wh_ref:  (H, 4H)    fused recurrent weights (bf16), i/f/o cols pre-scaled 0.5
    # b_ref:   (1, 4H)    fused (x-linear + h-linear) biases, i/f/o cols pre-scaled 0.5
    # scl_ref: (1, 4H)    activation scale  (1.0 for g lanes, 0.5 for i/f/o lanes)
    # off_ref: (1, 4H)    activation offset (0.0 for g lanes, 0.5 for i/f/o lanes)
    # wph_ref: (H, Opad)  output head weight, zero-padded to lane-dense width
    # bp_ref:  (1, Opad)  output head bias, padded with -1e30
    # out_ref: (B, Opad)  softmax probabilities (padded columns are exactly 0)
    B, T = x_ref.shape
    H = wh_ref.shape[0]

    wx = wx_ref[...]     # (1, 4H) f32
    wh = wh_ref[...]     # (H, 4H) bf16 (MXU operand)
    b = b_ref[...]       # (1, 4H) f32
    scl = scl_ref[...]   # (1, 4H) f32
    off = off_ref[...]   # (1, 4H) f32

    h = jnp.zeros((B, H), jnp.float32)
    c = jnp.zeros((B, H), jnp.float32)

    # Fully-unrolled recurrence: per step, ONE bf16 MXU matmul (f32 accumulate)
    # and ONE dense 128-lane tanh; gates recovered by a per-lane affine
    # (sigmoid(x) = 0.5 * (1 + tanh(x/2)), the 0.5 column scaling is baked into
    # wx/wh/b offline).
    for t in range(T):
        # Input-side pre-activation: computed in-loop (no h dependence, so it
        # overlaps with the previous step's MXU/EUP work; bounded live range).
        pre = x_ref[:, t:t + 1] * wx + b                               # (B, 4H) f32
        z = pre + jnp.dot(h.astype(jnp.bfloat16), wh,
                          preferred_element_type=jnp.float32)          # (B, 4H) f32
        act = jnp.tanh(z) * scl + off                                  # [g | i | f | o]
        g = act[:, 0 * H:1 * H]      # lane offset 0 -> no cross-lane move
        i = act[:, 1 * H:2 * H]      # fixed-offset lane slices -> XLU rotates,
        f = act[:, 2 * H:3 * H]      # overlap with VPU/EUP work
        o = act[:, 3 * H:4 * H]
        c = c * f + g * i
        h = jnp.tanh(c) * o

    # Output head (kept f32, runs once, off the serial chain) + stabilized
    # softmax over the padded class dim.  Padded logit columns carry a -1e30
    # bias -> exp() underflows to exactly 0, so the softmax over Opad lanes
    # equals the softmax over the O real classes.
    p = jnp.dot(h, wph_ref[...], preferred_element_type=jnp.float32) + bp_ref[...]
    m = jnp.max(p, axis=1, keepdims=True)
    e = jnp.exp(p - m)
    out_ref[...] = e / jnp.sum(e, axis=1, keepdims=True)


def _fuse_params(params):
    """Build the fused / pre-scaled / padded kernel operands from module params."""
    H = params["wgh"].shape[0]
    O = params["wph"].shape[1]

    wx_cat = jnp.concatenate(
        [params["wgx"], params["wix"], params["wfx"], params["wox"]], axis=1)  # (1, 4H)
    wh_cat = jnp.concatenate(
        [params["wgh"], params["wih"], params["wfh"], params["woh"]], axis=1)  # (H, 4H)
    b_cat = jnp.concatenate(
        [params["bg"], params["bi"], params["bf"], params["bo"]], axis=1)      # (1, 4H)

    # sigmoid(x) = 0.5*(1 + tanh(x/2)): pre-scale the i/f/o gate columns by 0.5
    # (exact in fp), then recover the gates with act = tanh(z)*scale + offset.
    col_scale = jnp.concatenate(
        [jnp.ones((1, H), jnp.float32), jnp.full((1, 3 * H), 0.5, jnp.float32)], axis=1)
    act_offset = jnp.concatenate(
        [jnp.zeros((1, H), jnp.float32), jnp.full((1, 3 * H), 0.5, jnp.float32)], axis=1)

    wx_s = wx_cat * col_scale                       # stays f32 (input projection)
    b_s = b_cat * col_scale                         # stays f32
    wh_s = (wh_cat * col_scale).astype(jnp.bfloat16)  # bf16 MXU operand (f32 accumulate)

    # Pad the output head to a lane-dense width (multiple of 128) so the final
    # store is unmasked; padded logits get a huge negative bias -> softmax 0.
    o_pad = max(128, ((O + 127) // 128) * 128)
    wph_pad = jnp.zeros((H, o_pad), jnp.float32).at[:, :O].set(params["wph"])
    bp_pad = jnp.full((1, o_pad), -1e30, jnp.float32).at[:, :O].set(params["bp"])

    return wx_s, wh_s, b_s, col_scale, act_offset, wph_pad, bp_pad, o_pad


def lstm_forward(x, params):
    """x: (B, T) float32 (the PyTorch module's input before unsqueeze)."""
    B, T = x.shape
    H = params["wgh"].shape[0]
    O = params["wph"].shape[1]
    # The original module's broadcasting only works when batch == hidden.
    assert B == H, f"module requires batch_size == hidden_dim (got B={B}, H={H})"

    wx_s, wh_s, b_s, scl, off, wph_pad, bp_pad, o_pad = _fuse_params(params)

    args = (x, wx_s, wh_s, b_s, scl, off, wph_pad, bp_pad)
    vmem = pl.BlockSpec(memory_space=pltpu.MemorySpace.VMEM)
    out_pad = pl.pallas_call(
        lstm_kernel,
        out_shape=jax.ShapeDtypeStruct((B, o_pad), jnp.float32),
        in_specs=[vmem] * len(args),
        out_specs=vmem,
    )(*args)
    return out_pad[:, :O]


def lstm_fused_reference(x, params):
    """Pure-JAX mirror of the kernel's exact numerics (bf16 MXU operands with
    f32 accumulation, sigmoid-via-tanh, padded head) for tight validation."""
    B, T = x.shape
    H = params["wgh"].shape[0]
    O = params["wph"].shape[1]
    wx_s, wh_s, b_s, scl, off, wph_pad, bp_pad, _ = _fuse_params(params)

    h = jnp.zeros((B, H), jnp.float32)
    c = jnp.zeros((B, H), jnp.float32)
    for t in range(T):
        pre = x[:, t:t + 1] * wx_s + b_s
        z = pre + jnp.dot(h.astype(jnp.bfloat16), wh_s,
                          preferred_element_type=jnp.float32)
        act = jnp.tanh(z) * scl + off
        g = act[:, 0 * H:1 * H]
        i = act[:, 1 * H:2 * H]
        f = act[:, 2 * H:3 * H]
        o = act[:, 3 * H:4 * H]
        c = c * f + g * i
        h = jnp.tanh(c) * o
    p = jnp.dot(h, wph_pad, preferred_element_type=jnp.float32,
                precision=jax.lax.Precision.HIGHEST) + bp_pad
    m = jnp.max(p, axis=1, keepdims=True)
    e = jnp.exp(p - m)
    sm = e / jnp.sum(e, axis=1, keepdims=True)
    return sm[:, :O]


def lstm_reference(x, params):
    """Pure-JAX f32 reference with the original module's semantics."""
    B, T = x.shape
    H = params["wgh"].shape[0]
    hi = jax.lax.Precision.HIGHEST
    h = jnp.zeros((B, H), jnp.float32)
    c = jnp.zeros((B, H), jnp.float32)
    for t in range(T):
        xt = x[:, t:t + 1]  # (B, 1)
        g = jnp.tanh(xt * params["wgx"] + jnp.dot(h, params["wgh"], precision=hi) + params["bg"])
        i = jax.nn.sigmoid(xt * params["wix"] + jnp.dot(h, params["wih"], precision=hi) + params["bi"])
        f = jax.nn.sigmoid(xt * params["wfx"] + jnp.dot(h, params["wfh"], precision=hi) + params["bf"])
        o = jax.nn.sigmoid(xt * params["wox"] + jnp.dot(h, params["woh"], precision=hi) + params["bo"])
        c = c * f + g * i
        h = jnp.tanh(c) * o
    p = jnp.dot(h, params["wph"], precision=hi) + params["bp"]
    return jax.nn.softmax(p, axis=1)


def make_params(key, input_dim, hidden_dim, output_dim):
    """Deterministic parameter init matching nn.Linear shapes.

    PyTorch nn.Linear(in, out): weight (out, in), bias (out,).
    We store the transposed weight (in, out) and combine the biases of the
    x- and h- linear layers for each gate (the module's bg/bi/bf/bo are zero).
    """
    keys = jax.random.split(key, 18)
    k = iter(keys)

    def lin(kw, kb, din, dout):
        w = jax.random.normal(kw, (dout, din), jnp.float32) * 0.1
        b = jax.random.normal(kb, (dout,), jnp.float32) * 0.1
        return w.T, b  # (din, dout), (dout,)

    wgx, bgx = lin(next(k), next(k), input_dim, hidden_dim)
    wgh, bgh = lin(next(k), next(k), hidden_dim, hidden_dim)
    wix, bix = lin(next(k), next(k), input_dim, hidden_dim)
    wih, bih = lin(next(k), next(k), hidden_dim, hidden_dim)
    wfx, bfx = lin(next(k), next(k), input_dim, hidden_dim)
    wfh, bfh = lin(next(k), next(k), hidden_dim, hidden_dim)
    wox, box = lin(next(k), next(k), input_dim, hidden_dim)
    woh, boh = lin(next(k), next(k), hidden_dim, hidden_dim)
    wph, bph = lin(next(k), next(k), hidden_dim, output_dim)

    return {
        "wgx": wgx, "wgh": wgh, "bg": (bgx + bgh)[None, :],
        "wix": wix, "wih": wih, "bi": (bix + bih)[None, :],
        "wfx": wfx, "wfh": wfh, "bf": (bfx + bfh)[None, :],
        "wox": wox, "woh": woh, "bo": (box + boh)[None, :],
        "wph": wph, "bp": bph[None, :],
    }


if __name__ == "__main__":
    # NOTE: the PyTorch module's broadcasting only works when batch == hidden.
    seq_length = 8
    input_dim = 1
    hidden_dim = 32
    output_dim = 10
    batch_size = 32  # must equal hidden_dim (see note above)

    key = jax.random.PRNGKey(0)
    kx, kp = jax.random.split(key)
    x = jax.random.normal(kx, (batch_size, seq_length), jnp.float32)
    params = make_params(kp, input_dim, hidden_dim, output_dim)

    out = lstm_forward(x, params)
    out = jax.block_until_ready(out)

    ref_matched = lstm_fused_reference(x, params)  # same numerics as the kernel
    ref_module = lstm_reference(x, params)         # exact f32 module semantics

    assert out.shape == (batch_size, output_dim)
    assert bool(jnp.allclose(out, ref_matched, atol=1e-5, rtol=1e-5)), \
        "mismatch vs numerics-matched reference"
    assert bool(jnp.allclose(out, ref_module, atol=1e-2, rtol=1e-2)), \
        "drift vs f32 module reference (bf16 MXU path)"
    assert bool(jnp.allclose(jnp.sum(out, axis=1), 1.0, atol=1e-5)), \
        "softmax rows must sum to 1"

    print("KERNEL_OK")
</pallas_src>

<mosaic_0001>
module attributes {stable_mosaic.version = 11 : i64} {
  func.func @lstm_kernel(%arg0: memref<32x8xf32, #tpu.memory_space<vmem>>, %arg1: memref<1x128xf32, #tpu.memory_space<vmem>>, %arg2: memref<32x128xbf16, #tpu.memory_space<vmem>>, %arg3: memref<1x128xf32, #tpu.memory_space<vmem>>, %arg4: memref<1x128xf32, #tpu.memory_space<vmem>>, %arg5: memref<1x128xf32, #tpu.memory_space<vmem>>, %arg6: memref<32x128xf32, #tpu.memory_space<vmem>>, %arg7: memref<1x128xf32, #tpu.memory_space<vmem>>, %arg8: memref<32x128xf32, #tpu.memory_space<vmem>>) attributes {dimension_semantics = [], scalar_prefetch = 0 : i64, scratch_operands = 0 : i64, tpu.core_type = #tpu.core_type<tc>} {
    %c0 = arith.constant 0 : index
    %c0_0 = arith.constant 0 : index
    %0 = vector.load %arg1[%c0, %c0_0] : memref<1x128xf32, #tpu.memory_space<vmem>>, vector<1x128xf32>
    %c0_1 = arith.constant 0 : index
    %c0_2 = arith.constant 0 : index
    %1 = vector.load %arg2[%c0_1, %c0_2] : memref<32x128xbf16, #tpu.memory_space<vmem>>, vector<32x128xbf16>
    %c0_3 = arith.constant 0 : index
    %c0_4 = arith.constant 0 : index
    %2 = vector.load %arg3[%c0_3, %c0_4] : memref<1x128xf32, #tpu.memory_space<vmem>>, vector<1x128xf32>
    %c0_5 = arith.constant 0 : index
    %c0_6 = arith.constant 0 : index
    %3 = vector.load %arg4[%c0_5, %c0_6] : memref<1x128xf32, #tpu.memory_space<vmem>>, vector<1x128xf32>
    %c0_7 = arith.constant 0 : index
    %c0_8 = arith.constant 0 : index
    %4 = vector.load %arg5[%c0_7, %c0_8] : memref<1x128xf32, #tpu.memory_space<vmem>>, vector<1x128xf32>
    %cst = arith.constant 0.000000e+00 : f32
    %5 = vector.broadcast %cst : f32 to vector<32x32xf32>
    %cst_9 = arith.constant 0.000000e+00 : f32
    %6 = vector.broadcast %cst_9 : f32 to vector<32x32xf32>
    %c0_10 = arith.constant 0 : index
    %c0_11 = arith.constant 0 : index
    %7 = vector.load %arg0[%c0_10, %c0_11] : memref<32x8xf32, #tpu.memory_space<vmem>>, vector<32x1xf32>
    %8 = vector.broadcast %7 : vector<32x1xf32> to vector<32x128xf32>
    %9 = vector.broadcast %0 : vector<1x128xf32> to vector<32x128xf32>
    %10 = arith.mulf %8, %9 : vector<32x128xf32>
    %11 = vector.broadcast %2 : vector<1x128xf32> to vector<32x128xf32>
    %12 = arith.addf %10, %11 : vector<32x128xf32>
    %13 = arith.truncf %5 : vector<32x32xf32> to vector<32x32xbf16>
    %cst_12 = arith.constant dense<0.000000e+00> : vector<32x128xf32>
    %14 = tpu.matmul %13, %1, %cst_12 {dimension_numbers = #tpu.dot_dimension_numbers<[1], [0], [0], [1], [0, 0, 1, 1], [], []>} : vector<32x32xbf16>, vector<32x128xbf16>, vector<32x128xf32> -> vector<32x128xf32>
    %15 = arith.addf %12, %14 : vector<32x128xf32>
    %16 = math.tanh %15 : vector<32x128xf32>
    %17 = vector.broadcast %3 : vector<1x128xf32> to vector<32x128xf32>
    %18 = arith.mulf %16, %17 : vector<32x128xf32>
    %19 = vector.broadcast %4 : vector<1x128xf32> to vector<32x128xf32>
    %20 = arith.addf %18, %19 : vector<32x128xf32>
    %21 = vector.extract_strided_slice %20 {offsets = [0, 0], sizes = [32, 32], strides = [1, 1]} : vector<32x128xf32> to vector<32x32xf32>
    %22 = vector.extract_strided_slice %20 {offsets = [0, 32], sizes = [32, 32], strides = [1, 1]} : vector<32x128xf32> to vector<32x32xf32>
    %23 = vector.extract_strided_slice %20 {offsets = [0, 64], sizes = [32, 32], strides = [1, 1]} : vector<32x128xf32> to vector<32x32xf32>
    %24 = vector.extract_strided_slice %20 {offsets = [0, 96], sizes = [32, 32], strides = [1, 1]} : vector<32x128xf32> to vector<32x32xf32>
    %25 = arith.mulf %6, %23 : vector<32x32xf32>
    %26 = arith.mulf %21, %22 : vector<32x32xf32>
    %27 = arith.addf %25, %26 : vector<32x32xf32>
    %28 = math.tanh %27 : vector<32x32xf32>
    %29 = arith.mulf %28, %24 : vector<32x32xf32>
    %c0_13 = arith.constant 0 : index
    %c1 = arith.constant 1 : index
    %30 = vector.load %arg0[%c0_13, %c1] : memref<32x8xf32, #tpu.memory_space<vmem>>, vector<32x1xf32>
    %31 = vector.broadcast %30 : vector<32x1xf32> to vector<32x128xf32>
    %32 = vector.broadcast %0 : vector<1x128xf32> to vector<32x128xf32>
    %33 = arith.mulf %31, %32 : vector<32x128xf32>
    %34 = vector.broadcast %2 : vector<1x128xf32> to vector<32x128xf32>
    %35 = arith.addf %33, %34 : vector<32x128xf32>
    %36 = arith.truncf %29 : vector<32x32xf32> to vector<32x32xbf16>
    %cst_14 = arith.constant dense<0.000000e+00> : vector<32x128xf32>
    %37 = tpu.matmul %36, %1, %cst_14 {dimension_numbers = #tpu.dot_dimension_numbers<[1], [0], [0], [1], [0, 0, 1, 1], [], []>} : vector<32x32xbf16>, vector<32x128xbf16>, vector<32x128xf32> -> vector<32x128xf32>
    %38 = arith.addf %35, %37 : vector<32x128xf32>
    %39 = math.tanh %38 : vector<32x128xf32>
    %40 = vector.broadcast %3 : vector<1x128xf32> to vector<32x128xf32>
    %41 = arith.mulf %39, %40 : vector<32x128xf32>
    %42 = vector.broadcast %4 : vector<1x128xf32> to vector<32x128xf32>
    %43 = arith.addf %41, %42 : vector<32x128xf32>
    %44 = vector.extract_strided_slice %43 {offsets = [0, 0], sizes = [32, 32], strides = [1, 1]} : vector<32x128xf32> to vector<32x32xf32>
    %45 = vector.extract_strided_slice %43 {offsets = [0, 32], sizes = [32, 32], strides = [1, 1]} : vector<32x128xf32> to vector<32x32xf32>
    %46 = vector.extract_strided_slice %43 {offsets = [0, 64], sizes = [32, 32], strides = [1, 1]} : vector<32x128xf32> to vector<32x32xf32>
    %47 = vector.extract_strided_slice %43 {offsets = [0, 96], sizes = [32, 32], strides = [1, 1]} : vector<32x128xf32> to vector<32x32xf32>
    %48 = arith.mulf %27, %46 : vector<32x32xf32>
    %49 = arith.mulf %44, %45 : vector<32x32xf32>
    %50 = arith.addf %48, %49 : vector<32x32xf32>
    %51 = math.tanh %50 : vector<32x32xf32>
    %52 = arith.mulf %51, %47 : vector<32x32xf32>
    %c0_15 = arith.constant 0 : index
    %c2 = arith.constant 2 : index
    %53 = vector.load %arg0[%c0_15, %c2] : memref<32x8xf32, #tpu.memory_space<vmem>>, vector<32x1xf32>
    %54 = vector.broadcast %53 : vector<32x1xf32> to vector<32x128xf32>
    %55 = vector.broadcast %0 : vector<1x128xf32> to vector<32x128xf32>
    %56 = arith.mulf %54, %55 : vector<32x128xf32>
    %57 = vector.broadcast %2 : vector<1x128xf32> to vector<32x128xf32>
    %58 = arith.addf %56, %57 : vector<32x128xf32>
    %59 = arith.truncf %52 : vector<32x32xf32> to vector<32x32xbf16>
    %cst_16 = arith.constant dense<0.000000e+00> : vector<32x128xf32>
    %60 = tpu.matmul %59, %1, %cst_16 {dimension_numbers = #tpu.dot_dimension_numbers<[1], [0], [0], [1], [0, 0, 1, 1], [], []>} : vector<32x32xbf16>, vector<32x128xbf16>, vector<32x128xf32> -> vector<32x128xf32>
    %61 = arith.addf %58, %60 : vector<32x128xf32>
    %62 = math.tanh %61 : vector<32x128xf32>
    %63 = vector.broadcast %3 : vector<1x128xf32> to vector<32x128xf32>
    %64 = arith.mulf %62, %63 : vector<32x128xf32>
    %65 = vector.broadcast %4 : vector<1x128xf32> to vector<32x128xf32>
    %66 = arith.addf %64, %65 : vector<32x128xf32>
    %67 = vector.extract_strided_slice %66 {offsets = [0, 0], sizes = [32, 32], strides = [1, 1]} : vector<32x128xf32> to vector<32x32xf32>
    %68 = vector.extract_strided_slice %66 {offsets = [0, 32], sizes = [32, 32], strides = [1, 1]} : vector<32x128xf32> to vector<32x32xf32>
    %69 = vector.extract_strided_slice %66 {offsets = [0, 64], sizes = [32, 32], strides = [1, 1]} : vector<32x128xf32> to vector<32x32xf32>
    %70 = vector.extract_strided_slice %66 {offsets = [0, 96], sizes = [32, 32], strides = [1, 1]} : vector<32x128xf32> to vector<32x32xf32>
    %71 = arith.mulf %50, %69 : vector<32x32xf32>
    %72 = arith.mulf %67, %68 : vector<32x32xf32>
    %73 = arith.addf %71, %72 : vector<32x32xf32>
    %74 = math.tanh %73 : vector<32x32xf32>
    %75 = arith.mulf %74, %70 : vector<32x32xf32>
    %c0_17 = arith.constant 0 : index
    %c3 = arith.constant 3 : index
    %76 = vector.load %arg0[%c0_17, %c3] : memref<32x8xf32, #tpu.memory_space<vmem>>, vector<32x1xf32>
    %77 = vector.broadcast %76 : vector<32x1xf32> to vector<32x128xf32>
    %78 = vector.broadcast %0 : vector<1x128xf32> to vector<32x128xf32>
    %79 = arith.mulf %77, %78 : vector<32x128xf32>
    %80 = vector.broadcast %2 : vector<1x128xf32> to vector<32x128xf32>
    %81 = arith.addf %79, %80 : vector<32x128xf32>
    %82 = arith.truncf %75 : vector<32x32xf32> to vector<32x32xbf16>
    %cst_18 = arith.constant dense<0.000000e+00> : vector<32x128xf32>
    %83 = tpu.matmul %82, %1, %cst_18 {dimension_numbers = #tpu.dot_dimension_numbers<[1], [0], [0], [1], [0, 0, 1, 1], [], []>} : vector<32x32xbf16>, vector<32x128xbf16>, vector<32x128xf32> -> vector<32x128xf32>
    %84 = arith.addf %81, %83 : vector<32x128xf32>
    %85 = math.tanh %84 : vector<32x128xf32>
    %86 = vector.broadcast %3 : vector<1x128xf32> to vector<32x128xf32>
    %87 = arith.mulf %85, %86 : vector<32x128xf32>
    %88 = vector.broadcast %4 : vector<1x128xf32> to vector<32x128xf32>
    %89 = arith.addf %87, %88 : vector<32x128xf32>
    %90 = vector.extract_strided_slice %89 {offsets = [0, 0], sizes = [32, 32], strides = [1, 1]} : vector<32x128xf32> to vector<32x32xf32>
    %91 = vector.extract_strided_slice %89 {offsets = [0, 32], sizes = [32, 32], strides = [1, 1]} : vector<32x128xf32> to vector<32x32xf32>
    %92 = vector.extract_strided_slice %89 {offsets = [0, 64], sizes = [32, 32], strides = [1, 1]} : vector<32x128xf32> to vector<32x32xf32>
    %93 = vector.extract_strided_slice %89 {offsets = [0, 96], sizes = [32, 32], strides = [1, 1]} : vector<32x128xf32> to vector<32x32xf32>
    %94 = arith.mulf %73, %92 : vector<32x32xf32>
    %95 = arith.mulf %90, %91 : vector<32x32xf32>
    %96 = arith.addf %94, %95 : vector<32x32xf32>
    %97 = math.tanh %96 : vector<32x32xf32>
    %98 = arith.mulf %97, %93 : vector<32x32xf32>
    %c0_19 = arith.constant 0 : index
    %c4 = arith.constant 4 : index
    %99 = vector.load %arg0[%c0_19, %c4] : memref<32x8xf32, #tpu.memory_space<vmem>>, vector<32x1xf32>
    %100 = vector.broadcast %99 : vector<32x1xf32> to vector<32x128xf32>
    %101 = vector.broadcast %0 : vector<1x128xf32> to vector<32x128xf32>
    %102 = arith.mulf %100, %101 : vector<32x128xf32>
    %103 = vector.broadcast %2 : vector<1x128xf32> to vector<32x128xf32>
    %104 = arith.addf %102, %103 : vector<32x128xf32>
    %105 = arith.truncf %98 : vector<32x32xf32> to vector<32x32xbf16>
    %cst_20 = arith.constant dense<0.000000e+00> : vector<32x128xf32>
    %106 = tpu.matmul %105, %1, %cst_20 {dimension_numbers = #tpu.dot_dimension_numbers<[1], [0], [0], [1], [0, 0, 1, 1], [], []>} : vector<32x32xbf16>, vector<32x128xbf16>, vector<32x128xf32> -> vector<32x128xf32>
    %107 = arith.addf %104, %106 : vector<32x128xf32>
    %108 = math.tanh %107 : vector<32x128xf32>
    %109 = vector.broadcast %3 : vector<1x128xf32> to vector<32x128xf32>
    %110 = arith.mulf %108, %109 : vector<32x128xf32>
    %111 = vector.broadcast %4 : vector<1x128xf32> to vector<32x128xf32>
    %112 = arith.addf %110, %111 : vector<32x128xf32>
    %113 = vector.extract_strided_slice %112 {offsets = [0, 0], sizes = [32, 32], strides = [1, 1]} : vector<32x128xf32> to vector<32x32xf32>
    %114 = vector.extract_strided_slice %112 {offsets = [0, 32], sizes = [32, 32], strides = [1, 1]} : vector<32x128xf32> to vector<32x32xf32>
    %115 = vector.extract_strided_slice %112 {offsets = [0, 64], sizes = [32, 32], strides = [1, 1]} : vector<32x128xf32> to vector<32x32xf32>
    %116 = vector.extract_strided_slice %112 {offsets = [0, 96], sizes = [32, 32], strides = [1, 1]} : vector<32x128xf32> to vector<32x32xf32>
    %117 = arith.mulf %96, %115 : vector<32x32xf32>
    %118 = arith.mulf %113, %114 : vector<32x32xf32>
    %119 = arith.addf %117, %118 : vector<32x32xf32>
    %120 = math.tanh %119 : vector<32x32xf32>
    %121 = arith.mulf %120, %116 : vector<32x32xf32>
    %c0_21 = arith.constant 0 : index
    %c5 = arith.constant 5 : index
    %122 = vector.load %arg0[%c0_21, %c5] : memref<32x8xf32, #tpu.memory_space<vmem>>, vector<32x1xf32>
    %123 = vector.broadcast %122 : vector<32x1xf32> to vector<32x128xf32>
    %124 = vector.broadcast %0 : vector<1x128xf32> to vector<32x128xf32>
    %125 = arith.mulf %123, %124 : vector<32x128xf32>
    %126 = vector.broadcast %2 : vector<1x128xf32> to vector<32x128xf32>
    %127 = arith.addf %125, %126 : vector<32x128xf32>
    %128 = arith.truncf %121 : vector<32x32xf32> to vector<32x32xbf16>
    %cst_22 = arith.constant dense<0.000000e+00> : vector<32x128xf32>
    %129 = tpu.matmul %128, %1, %cst_22 {dimension_numbers = #tpu.dot_dimension_numbers<[1], [0], [0], [1], [0, 0, 1, 1], [], []>} : vector<32x32xbf16>, vector<32x128xbf16>, vector<32x128xf32> -> vector<32x128xf32>
    %130 = arith.addf %127, %129 : vector<32x128xf32>
    %131 = math.tanh %130 : vector<32x128xf32>
    %132 = vector.broadcast %3 : vector<1x128xf32> to vector<32x128xf32>
    %133 = arith.mulf %131, %132 : vector<32x128xf32>
    %134 = vector.broadcast %4 : vector<1x128xf32> to vector<32x128xf32>
    %135 = arith.addf %133, %134 : vector<32x128xf32>
    %136 = vector.extract_strided_slice %135 {offsets = [0, 0], sizes = [32, 32], strides = [1, 1]} : vector<32x128xf32> to vector<32x32xf32>
    %137 = vector.extract_strided_slice %135 {offsets = [0, 32], sizes = [32, 32], strides = [1, 1]} : vector<32x128xf32> to vector<32x32xf32>
    %138 = vector.extract_strided_slice %135 {offsets = [0, 64], sizes = [32, 32], strides = [1, 1]} : vector<32x128xf32> to vector<32x32xf32>
    %139 = vector.extract_strided_slice %135 {offsets = [0, 96], sizes = [32, 32], strides = [1, 1]} : vector<32x128xf32> to vector<32x32xf32>
    %140 = arith.mulf %119, %138 : vector<32x32xf32>
    %141 = arith.mulf %136, %137 : vector<32x32xf32>
    %142 = arith.addf %140, %141 : vector<32x32xf32>
    %143 = math.tanh %142 : vector<32x32xf32>
    %144 = arith.mulf %143, %139 : vector<32x32xf32>
    %c0_23 = arith.constant 0 : index
    %c6 = arith.constant 6 : index
    %145 = vector.load %arg0[%c0_23, %c6] : memref<32x8xf32, #tpu.memory_space<vmem>>, vector<32x1xf32>
    %146 = vector.broadcast %145 : vector<32x1xf32> to vector<32x128xf32>
    %147 = vector.broadcast %0 : vector<1x128xf32> to vector<32x128xf32>
    %148 = arith.mulf %146, %147 : vector<32x128xf32>
    %149 = vector.broadcast %2 : vector<1x128xf32> to vector<32x128xf32>
    %150 = arith.addf %148, %149 : vector<32x128xf32>
    %151 = arith.truncf %144 : vector<32x32xf32> to vector<32x32xbf16>
    %cst_24 = arith.constant dense<0.000000e+00> : vector<32x128xf32>
    %152 = tpu.matmul %151, %1, %cst_24 {dimension_numbers = #tpu.dot_dimension_numbers<[1], [0], [0], [1], [0, 0, 1, 1], [], []>} : vector<32x32xbf16>, vector<32x128xbf16>, vector<32x128xf32> -> vector<32x128xf32>
    %153 = arith.addf %150, %152 : vector<32x128xf32>
    %154 = math.tanh %153 : vector<32x128xf32>
    %155 = vector.broadcast %3 : vector<1x128xf32> to vector<32x128xf32>
    %156 = arith.mulf %154, %155 : vector<32x128xf32>
    %157 = vector.broadcast %4 : vector<1x128xf32> to vector<32x128xf32>
    %158 = arith.addf %156, %157 : vector<32x128xf32>
    %159 = vector.extract_strided_slice %158 {offsets = [0, 0], sizes = [32, 32], strides = [1, 1]} : vector<32x128xf32> to vector<32x32xf32>
    %160 = vector.extract_strided_slice %158 {offsets = [0, 32], sizes = [32, 32], strides = [1, 1]} : vector<32x128xf32> to vector<32x32xf32>
    %161 = vector.extract_strided_slice %158 {offsets = [0, 64], sizes = [32, 32], strides = [1, 1]} : vector<32x128xf32> to vector<32x32xf32>
    %162 = vector.extract_strided_slice %158 {offsets = [0, 96], sizes = [32, 32], strides = [1, 1]} : vector<32x128xf32> to vector<32x32xf32>
    %163 = arith.mulf %142, %161 : vector<32x32xf32>
    %164 = arith.mulf %159, %160 : vector<32x32xf32>
    %165 = arith.addf %163, %164 : vector<32x32xf32>
    %166 = math.tanh %165 : vector<32x32xf32>
    %167 = arith.mulf %166, %162 : vector<32x32xf32>
    %c0_25 = arith.constant 0 : index
    %c7 = arith.constant 7 : index
    %168 = vector.load %arg0[%c0_25, %c7] : memref<32x8xf32, #tpu.memory_space<vmem>>, vector<32x1xf32>
    %169 = vector.broadcast %168 : vector<32x1xf32> to vector<32x128xf32>
    %170 = vector.broadcast %0 : vector<1x128xf32> to vector<32x128xf32>
    %171 = arith.mulf %169, %170 : vector<32x128xf32>
    %172 = vector.broadcast %2 : vector<1x128xf32> to vector<32x128xf32>
    %173 = arith.addf %171, %172 : vector<32x128xf32>
    %174 = arith.truncf %167 : vector<32x32xf32> to vector<32x32xbf16>
    %cst_26 = arith.constant dense<0.000000e+00> : vector<32x128xf32>
    %175 = tpu.matmul %174, %1, %cst_26 {dimension_numbers = #tpu.dot_dimension_numbers<[1], [0], [0], [1], [0, 0, 1, 1], [], []>} : vector<32x32xbf16>, vector<32x128xbf16>, vector<32x128xf32> -> vector<32x128xf32>
    %176 = arith.addf %173, %175 : vector<32x128xf32>
    %177 = math.tanh %176 : vector<32x128xf32>
    %178 = vector.broadcast %3 : vector<1x128xf32> to vector<32x128xf32>
    %179 = arith.mulf %177, %178 : vector<32x128xf32>
    %180 = vector.broadcast %4 : vector<1x128xf32> to vector<32x128xf32>
    %181 = arith.addf %179, %180 : vector<32x128xf32>
    %182 = vector.extract_strided_slice %181 {offsets = [0, 0], sizes = [32, 32], strides = [1, 1]} : vector<32x128xf32> to vector<32x32xf32>
    %183 = vector.extract_strided_slice %181 {offsets = [0, 32], sizes = [32, 32], strides = [1, 1]} : vector<32x128xf32> to vector<32x32xf32>
    %184 = vector.extract_strided_slice %181 {offsets = [0, 64], sizes = [32, 32], strides = [1, 1]} : vector<32x128xf32> to vector<32x32xf32>
    %185 = vector.extract_strided_slice %181 {offsets = [0, 96], sizes = [32, 32], strides = [1, 1]} : vector<32x128xf32> to vector<32x32xf32>
    %186 = arith.mulf %165, %184 : vector<32x32xf32>
    %187 = arith.mulf %182, %183 : vector<32x32xf32>
    %188 = arith.addf %186, %187 : vector<32x32xf32>
    %189 = math.tanh %188 : vector<32x32xf32>
    %190 = arith.mulf %189, %185 : vector<32x32xf32>
    %c0_27 = arith.constant 0 : index
    %c0_28 = arith.constant 0 : index
    %191 = vector.load %arg6[%c0_27, %c0_28] : memref<32x128xf32, #tpu.memory_space<vmem>>, vector<32x128xf32>
    %cst_29 = arith.constant dense<0.000000e+00> : vector<32x128xf32>
    %192 = tpu.matmul %190, %191, %cst_29 {dimension_numbers = #tpu.dot_dimension_numbers<[1], [0], [0], [1], [0, 0, 1, 1], [], []>} : vector<32x32xf32>, vector<32x128xf32>, vector<32x128xf32> -> vector<32x128xf32>
    %c0_30 = arith.constant 0 : index
    %c0_31 = arith.constant 0 : index
    %193 = vector.load %arg7[%c0_30, %c0_31] : memref<1x128xf32, #tpu.memory_space<vmem>>, vector<1x128xf32>
    %194 = vector.broadcast %193 : vector<1x128xf32> to vector<32x128xf32>
    %195 = arith.addf %192, %194 : vector<32x128xf32>
    %cst_32 = arith.constant dense<0xFF800000> : vector<32xf32>
    %196 = vector.multi_reduction <maximumf>, %195, %cst_32 [1] : vector<32x128xf32> to vector<32xf32>
    %197 = vector.shape_cast %196 : vector<32xf32> to vector<32x1xf32>
    %198 = vector.broadcast %197 : vector<32x1xf32> to vector<32x128xf32>
    %199 = arith.subf %195, %198 : vector<32x128xf32>
    %200 = math.exp %199 : vector<32x128xf32>
    %cst_33 = arith.constant dense<0.000000e+00> : vector<32xf32>
    %201 = vector.multi_reduction <add>, %200, %cst_33 [1] : vector<32x128xf32> to vector<32xf32>
    %202 = vector.shape_cast %201 : vector<32xf32> to vector<32x1xf32>
    %203 = vector.broadcast %202 : vector<32x1xf32> to vector<32x128xf32>
    %204 = arith.divf %200, %203 : vector<32x128xf32>
    %c0_34 = arith.constant 0 : index
    %c0_35 = arith.constant 0 : index
    %205 = vector.load %arg8[%c0_34, %c0_35] : memref<32x128xf32, #tpu.memory_space<vmem>>, vector<32x128xf32>
    tpu.vector_store %arg8[%c0_34, %c0_35], %204 {strides = array<i32>} : memref<32x128xf32, #tpu.memory_space<vmem>>, vector<32x128xf32>,
    return
  }
}

</mosaic_0001>

<llo_original>
// kernel: tpu_custom_call.1
$region0: #{tpu_custom_call.1}
  #allocation0 [shape = 'u32[]', space=smem, size = 0x4, offset = 0x4, fixed_abs, tag = 'smem constant byte address 0x4 - core index']
  #allocation1 [shape = 'u32[144,128]{1,0:T(1,128)}', space=vmem, size = 0x12000, scoped, tag = 'internal scratch']
  %s0 = inlined_call_operand.vmem [shape: f32[32,8], index: 0, kind: input, shape index: {}]
  %s1 = inlined_call_operand.vmem [shape: f32[1,128], index: 1, kind: input, shape index: {}]
  %s2 = inlined_call_operand.vmem [shape: bf16[32,128], index: 2, kind: input, shape index: {}]
  %s3 = inlined_call_operand.vmem [shape: f32[1,128], index: 3, kind: input, shape index: {}]
  %s4 = inlined_call_operand.vmem [shape: f32[1,128], index: 4, kind: input, shape index: {}]
  %s5 = inlined_call_operand.vmem [shape: f32[1,128], index: 5, kind: input, shape index: {}]
  %s6 = inlined_call_operand.vmem [shape: f32[32,128], index: 6, kind: input, shape index: {}]
  %s7 = inlined_call_operand.vmem [shape: f32[1,128], index: 7, kind: input, shape index: {}]
  %s8 = inlined_call_operand.hbm [shape: f32[32,128], index: 8, kind: output, shape index: {}]
  %s9 = sld [smem:[#allocation0]]
  $region42: #{tpu_custom_call.1} parent=0
    _
  %s11 = ssub.s32 1, %s9
  %s12 = scalar_select 0, %s11, %s9
  $region1: #{tpu_custom_call.1} parent=0
    #allocation2 [shape = 'u8[16384]{0}', space=vmem, size = 0x4000, scoped, tag = 'output window, operand 0, single buffered']
    #allocation3 [shape = 's32[1]{0}', space=sflag, size = 0x4, scoped, tag = 'scoped memory for tpu_custom_call.1']
    %13 = vsyncpa [#allocation3], 0
    // Predicated region
    $region2: #{tpu_custom_call.1} parent=1 // pred_check
      _
    $region3: #{tpu_custom_call.1} parent=1 // pred_check_branch
      %15 = sbr.rel (0) target = $region5
    $region4: #{tpu_custom_call.1} parent=1 // pred_region
      _
    $region5: #{tpu_custom_call.1} parent=1 // pred_fallthru
      _
    // Predicated region
    $region6: #{tpu_custom_call.1} parent=1 // pred_check
      _
    $region7: #{tpu_custom_call.1} parent=1 // pred_check_branch
      %17 = sbr.rel (0) target = $region9
    $region8: #{tpu_custom_call.1} parent=1 // pred_region
      _
    $region9: #{tpu_custom_call.1} parent=1 // pred_fallthru
      _
    // Predicated region
    $region10: #{tpu_custom_call.1} parent=1 // pred_check
      _
    $region11: #{tpu_custom_call.1} parent=1 // pred_check_branch
      %19 = sbr.rel (0) target = $region13
    $region12: #{tpu_custom_call.1} parent=1 // pred_region
      _
    $region13: #{tpu_custom_call.1} parent=1 // pred_fallthru
      _
    // Predicated region
    $region14: #{tpu_custom_call.1} parent=1 // pred_check
      _
    $region15: #{tpu_custom_call.1} parent=1 // pred_check_branch
      %21 = sbr.rel (0) target = $region17
    $region16: #{tpu_custom_call.1} parent=1 // pred_region
      _
    $region17: #{tpu_custom_call.1} parent=1 // pred_fallthru
      _
    // Predicated region
    $region18: #{tpu_custom_call.1} parent=1 // pred_check
      _
    $region19: #{tpu_custom_call.1} parent=1 // pred_check_branch
      %23 = sbr.rel (0) target = $region21
    $region20: #{tpu_custom_call.1} parent=1 // pred_region
      _
    $region21: #{tpu_custom_call.1} parent=1 // pred_fallthru
      _
    // Predicated region
    $region22: #{tpu_custom_call.1} parent=1 // pred_check
      _
    $region23: #{tpu_custom_call.1} parent=1 // pred_check_branch
      %25 = sbr.rel (0) target = $region25
    $region24: #{tpu_custom_call.1} parent=1 // pred_region
      _
    $region25: #{tpu_custom_call.1} parent=1 // pred_fallthru
      _
    // Predicated region
    $region26: #{tpu_custom_call.1} parent=1 // pred_check
      _
    $region27: #{tpu_custom_call.1} parent=1 // pred_check_branch
      %27 = sbr.rel (0) target = $region29
    $region28: #{tpu_custom_call.1} parent=1 // pred_region
      _
    $region29: #{tpu_custom_call.1} parent=1 // pred_fallthru
      _
    // Predicated region
    $region30: #{tpu_custom_call.1} parent=1 // pred_check
      _
    $region31: #{tpu_custom_call.1} parent=1 // pred_check_branch
      %29 = sbr.rel (0) target = $region33
    $region32: #{tpu_custom_call.1} parent=1 // pred_region
      _
    $region33: #{tpu_custom_call.1} parent=1 // pred_fallthru
      _
    %v31 = vld [vmem:[%s1] sm:$0x1]
    %v32 = vld [vmem:[%s2] sm:$0xf]
    %v33 = vld [vmem:[%s2 + $0x4] sm:$0xf]
    %v34 = vld [vmem:[%s2 + $0x8] sm:$0xf]
    %v35 = vld [vmem:[%s2 + $0xc] sm:$0xf]
    %v36 = vld [vmem:[%s3] sm:$0x1]
    %v37 = vld [vmem:[%s4] sm:$0x1]
    %v38 = vld [vmem:[%s5] sm:$0x1]
    %v39 = vld [vmem:[%s0] sm:$0xff]
    %v40 = vld [vmem:[%s0 + $0x8] sm:$0xff]
    %v41 = vld [vmem:[%s0 + $0x10] sm:$0xff]
    %v42 = vld [vmem:[%s0 + $0x18] sm:$0xff]
    %44 = vset.pattern.permute.xlu0 0
    %45 = vperm.xlu0 %44, %v39
    %v46 = vpop.permute.xlu0 %45
    %49 = vset.pattern.permute.xlu0 0
    %50 = vperm.xlu0 %49, %v40
    %v51 = vpop.permute.xlu0 %50
    %54 = vset.pattern.permute.xlu0 0
    %55 = vperm.xlu0 %54, %v41
    %v56 = vpop.permute.xlu0 %55
    %59 = vset.pattern.permute.xlu0 0
    %60 = vperm.xlu0 %59, %v42
    %v61 = vpop.permute.xlu0 %60
    %v64 = vlaneseq
    %v65 = vshrl.u32 %v64, 7
    %v66 = vsub.s32 0, %v65
    %v67 = vrot.slane %v31, %v66
    %v69 = vmul.f32 %v46, %v67
    %v70 = vmul.f32 %v51, %v67
    %v71 = vmul.f32 %v56, %v67
    %v72 = vmul.f32 %v61, %v67
    %v74 = vlaneseq
    %v75 = vshrl.u32 %v74, 7
    %v76 = vsub.s32 0, %v75
    %v77 = vrot.slane %v36, %v76
    %v79 = vadd.f32 %v69, %v77
    %v80 = vadd.f32 %v70, %v77
    %v81 = vadd.f32 %v71, %v77
    %v82 = vadd.f32 %v72, %v77
    %v87 = vunpack.c.l.b16 %v32
    %v88 = vunpack.c.l.b16 %v33
    %v89 = vunpack.c.l.b16 %v34
    %v90 = vunpack.c.l.b16 %v35
    %v91 = vpack.c.b16 %v88, %v87
    %v92 = vpack.c.b16 %v90, %v89
    %vm95 = vcmask 261120
    %v97 = vsel %vm95, 0, 0
    %99 = vmatprep.subr.bf16.mxu0 0
    %100 = vmatpush1.bf16.msra.mxu0 %v91
    %101 = vmatprep.subr.bf16.mxu0 0
    %102 = vmatpush1.bf16.msra.mxu0 %v92
    %103 = vmatprep.subr.bf16.mxu0 0
    %104 = vmatpush1.bf16.msra.mxu0 0
    %105 = vmatprep.subr.bf16.mxu0 0
    %106 = vmatpush1.bf16.msra.mxu0 0
    %107 = vmatprep.subr.bf16.mxu0 0
    %108 = vmatpush1.bf16.msra.mxu0 0
    %109 = vmatprep.subr.bf16.mxu0 0
    %110 = vmatpush1.bf16.msra.mxu0 0
    %111 = vmatprep.subr.bf16.mxu0 0
    %112 = vmatpush1.bf16.msra.mxu0 0
    %113 = vmatprep.subr.bf16.mxu0 0
    %114 = vmatpush1.bf16.msra.mxu0 0
    %115 = vmatprep.subr.bf16.mxu0 0
    %116 = vmatpush1.bf16.msra.mxu0 0
    %117 = vmatprep.subr.bf16.mxu0 0
    %118 = vmatpush1.bf16.msra.mxu0 0
    %119 = vmatprep.subr.bf16.mxu0 0
    %120 = vmatpush1.bf16.msra.mxu0 0
    %121 = vmatprep.subr.bf16.mxu0 0
    %122 = vmatpush1.bf16.msra.mxu0 0
    %123 = vmatprep.subr.bf16.mxu0 0
    %124 = vmatpush1.bf16.msra.mxu0 0
    %125 = vmatprep.subr.bf16.mxu0 0
    %126 = vmatpush1.bf16.msra.mxu0 0
    %127 = vmatprep.subr.bf16.mxu0 0
    %128 = vmatpush1.bf16.msra.mxu0 0
    %129 = vmatprep.subr.bf16.mxu0 0
    %130 = vmatpush1.bf16.msra.mxu0 0
    %131 = vmatprep.mubr.bf16.mxu0 0
    %132 = vmatmul.mubr.bf16.gmra.mrb[0].mxu0 %v97
    %v133 = vpop.f32.mrb[0].mxu0
    %v134 = vadd.f32 0.0, %v133
    %v135 = vpop.f32.mrb[0].mxu0
    %v136 = vpop.f32.mrb[0].mxu0
    %v137 = vadd.f32 0.0, %v136
    %v138 = vpop.f32.mrb[0].mxu0
    %139 = vmatprep.mubr.bf16.mxu0 0
    %140 = vmatmul.mubr.bf16.gmra.mrb[0].mxu0 %v97
    %v141 = vpop.f32.mrb[0].mxu0
    %v142 = vadd.f32 0.0, %v141
    %v143 = vpop.f32.mrb[0].mxu0
    %v144 = vpop.f32.mrb[0].mxu0
    %v145 = vadd.f32 0.0, %v144
    %v146 = vpop.f32.mrb[0].mxu0
    %147 = vdwg.mxu0
    %v148 = vadd.f32 %v79, %v134
    %v149 = vadd.f32 %v80, %v137
    %v150 = vadd.f32 %v81, %v142
    %v151 = vadd.f32 %v82, %v145
    %v152 = vtanh.pop %v148
    %v153 = vtanh.pop %v149
    %v154 = vtanh.pop %v150
    %v155 = vtanh.pop %v151
    %v157 = vlaneseq
    %v158 = vshrl.u32 %v157, 7
    %v159 = vsub.s32 0, %v158
    %v160 = vrot.slane %v37, %v159
    %v162 = vmul.f32 %v152, %v160
    %v163 = vmul.f32 %v153, %v160
    %v164 = vmul.f32 %v154, %v160
    %v165 = vmul.f32 %v155, %v160
    %v167 = vlaneseq
    %v168 = vshrl.u32 %v167, 7
    %v169 = vsub.s32 0, %v168
    %v170 = vrot.slane %v38, %v169
    %v172 = vadd.f32 %v162, %v170
    %v173 = vadd.f32 %v163, %v170
    %v174 = vadd.f32 %v164, %v170
    %v175 = vadd.f32 %v165, %v170
    %v176 = vmul.f32 %v172, 0.0
    %v177 = vmul.f32 %v173, 0.0
    %v178 = vmul.f32 %v174, 0.0
    %v179 = vmul.f32 %v175, 0.0
    %184 = vrot.lane.b32.xlu0 %v172, 96
    %v185 = vpop.permute.xlu0 %184
    %186 = vrot.lane.b32.xlu0 %v173, 96
    %v187 = vpop.permute.xlu0 %186
    %188 = vrot.lane.b32.xlu0 %v174, 96
    %v189 = vpop.permute.xlu0 %188
    %190 = vrot.lane.b32.xlu0 %v175, 96
    %v191 = vpop.permute.xlu0 %190
    %v196 = vmul.f32 %v172, %v185
    %v197 = vmul.f32 %v173, %v187
    %v198 = vmul.f32 %v174, %v189
    %v199 = vmul.f32 %v175, %v191
    %204 = vrot.lane.b32.xlu0 %v196, 64
    %v205 = vpop.permute.xlu0 %204
    %206 = vrot.lane.b32.xlu0 %v197, 64
    %v207 = vpop.permute.xlu0 %206
    %208 = vrot.lane.b32.xlu0 %v198, 64
    %v209 = vpop.permute.xlu0 %208
    %210 = vrot.lane.b32.xlu0 %v199, 64
    %v211 = vpop.permute.xlu0 %210
    %v216 = vadd.f32 %v176, %v205
    %v217 = vadd.f32 %v177, %v207
    %v218 = vadd.f32 %v178, %v209
    %v219 = vadd.f32 %v179, %v211
    %v220 = vtanh.pop %v216
    %v221 = vtanh.pop %v217
    %v222 = vtanh.pop %v218
    %v223 = vtanh.pop %v219
    %v224 = vmul.f32 %v220, %v185
    %v225 = vmul.f32 %v221, %v187
    %v226 = vmul.f32 %v222, %v189
    %v227 = vmul.f32 %v223, %v191
    %228 = vset.pattern.permute.xlu0 1
    %229 = vperm.xlu0 %228, %v39
    %v230 = vpop.permute.xlu0 %229
    %232 = vset.pattern.permute.xlu0 1
    %233 = vperm.xlu0 %232, %v40
    %v234 = vpop.permute.xlu0 %233
    %236 = vset.pattern.permute.xlu0 1
    %237 = vperm.xlu0 %236, %v41
    %v238 = vpop.permute.xlu0 %237
    %240 = vset.pattern.permute.xlu0 1
    %241 = vperm.xlu0 %240, %v42
    %v242 = vpop.permute.xlu0 %241
    %v244 = vmul.f32 %v230, %v67
    %v245 = vmul.f32 %v234, %v67
    %v246 = vmul.f32 %v238, %v67
    %v247 = vmul.f32 %v242, %v67
    %v248 = vadd.f32 %v244, %v77
    %v249 = vadd.f32 %v245, %v77
    %v250 = vadd.f32 %v246, %v77
    %v251 = vadd.f32 %v247, %v77
    %v252 = vpack.c.bf16 %v225, %v224
    %v253 = vpack.c.bf16 %v227, %v226
    %256 = vrot.lane.b32.xlu0 %v252, 64
    %v257 = vpop.permute.xlu0 %256
    %258 = vrot.lane.b32.xlu0 %v253, 64
    %v259 = vpop.permute.xlu0 %258
    %v261 = vsel %vm95, %v257, 0
    %v264 = vsel %vm95, %v259, 0
    %266 = vmatprep.subr.bf16.mxu0 0
    %267 = vmatpush1.bf16.msra.mxu0 %v91
    %268 = vmatprep.subr.bf16.mxu0 0
    %269 = vmatpush1.bf16.msra.mxu0 %v92
    %270 = vmatprep.subr.bf16.mxu0 0
    %271 = vmatpush1.bf16.msra.mxu0 0
    %272 = vmatprep.subr.bf16.mxu0 0
    %273 = vmatpush1.bf16.msra.mxu0 0
    %274 = vmatprep.subr.bf16.mxu0 0
    %275 = vmatpush1.bf16.msra.mxu0 0
    %276 = vmatprep.subr.bf16.mxu0 0
    %277 = vmatpush1.bf16.msra.mxu0 0
    %278 = vmatprep.subr.bf16.mxu0 0
    %279 = vmatpush1.bf16.msra.mxu0 0
    %280 = vmatprep.subr.bf16.mxu0 0
    %281 = vmatpush1.bf16.msra.mxu0 0
    %282 = vmatprep.subr.bf16.mxu0 0
    %283 = vmatpush1.bf16.msra.mxu0 0
    %284 = vmatprep.subr.bf16.mxu0 0
    %285 = vmatpush1.bf16.msra.mxu0 0
    %286 = vmatprep.subr.bf16.mxu0 0
    %287 = vmatpush1.bf16.msra.mxu0 0
    %288 = vmatprep.subr.bf16.mxu0 0
    %289 = vmatpush1.bf16.msra.mxu0 0
    %290 = vmatprep.subr.bf16.mxu0 0
    %291 = vmatpush1.bf16.msra.mxu0 0
    %292 = vmatprep.subr.bf16.mxu0 0
    %293 = vmatpush1.bf16.msra.mxu0 0
    %294 = vmatprep.subr.bf16.mxu0 0
    %295 = vmatpush1.bf16.msra.mxu0 0
    %296 = vmatprep.subr.bf16.mxu0 0
    %297 = vmatpush1.bf16.msra.mxu0 0
    %298 = vmatprep.mubr.bf16.mxu0 0
    %299 = vmatmul.mubr.bf16.gmra.mrb[0].mxu0 %v261
    %v300 = vpop.f32.mrb[0].mxu0
    %v301 = vadd.f32 0.0, %v300
    %v302 = vpop.f32.mrb[0].mxu0
    %v303 = vpop.f32.mrb[0].mxu0
    %v304 = vadd.f32 0.0, %v303
    %v305 = vpop.f32.mrb[0].mxu0
    %306 = vmatprep.mubr.bf16.mxu0 0
    %307 = vmatmul.mubr.bf16.gmra.mrb[0].mxu0 %v264
    %v308 = vpop.f32.mrb[0].mxu0
    %v309 = vadd.f32 0.0, %v308
    %v310 = vpop.f32.mrb[0].mxu0
    %v311 = vpop.f32.mrb[0].mxu0
    %v312 = vadd.f32 0.0, %v311
    %v313 = vpop.f32.mrb[0].mxu0
    %314 = vdwg.mxu0
    %v315 = vadd.f32 %v248, %v301
    %v316 = vadd.f32 %v249, %v304
    %v317 = vadd.f32 %v250, %v309
    %v318 = vadd.f32 %v251, %v312
    %v319 = vtanh.pop %v315
    %v320 = vtanh.pop %v316
    %v321 = vtanh.pop %v317
    %v322 = vtanh.pop %v318
    %v323 = vmul.f32 %v319, %v160
    %v324 = vmul.f32 %v320, %v160
    %v325 = vmul.f32 %v321, %v160
    %v326 = vmul.f32 %v322, %v160
    %v327 = vadd.f32 %v323, %v170
    %v328 = vadd.f32 %v324, %v170
    %v329 = vadd.f32 %v325, %v170
    %v330 = vadd.f32 %v326, %v170
    %v331 = vmul.f32 %v216, %v327
    %v332 = vmul.f32 %v217, %v328
    %v333 = vmul.f32 %v218, %v329
    %v334 = vmul.f32 %v219, %v330
    %339 = vrot.lane.b32.xlu0 %v327, 96
    %v340 = vpop.permute.xlu0 %339
    %341 = vrot.lane.b32.xlu0 %v328, 96
    %v342 = vpop.permute.xlu0 %341
    %343 = vrot.lane.b32.xlu0 %v329, 96
    %v344 = vpop.permute.xlu0 %343
    %345 = vrot.lane.b32.xlu0 %v330, 96
    %v346 = vpop.permute.xlu0 %345
    %v351 = vmul.f32 %v327, %v340
    %v352 = vmul.f32 %v328, %v342
    %v353 = vmul.f32 %v329, %v344
    %v354 = vmul.f32 %v330, %v346
    %359 = vrot.lane.b32.xlu0 %v351, 64
    %v360 = vpop.permute.xlu0 %359
    %361 = vrot.lane.b32.xlu0 %v352, 64
    %v362 = vpop.permute.xlu0 %361
    %363 = vrot.lane.b32.xlu0 %v353, 64
    %v364 = vpop.permute.xlu0 %363
    %365 = vrot.lane.b32.xlu0 %v354, 64
    %v366 = vpop.permute.xlu0 %365
    %v371 = vadd.f32 %v331, %v360
    %v372 = vadd.f32 %v332, %v362
    %v373 = vadd.f32 %v333, %v364
    %v374 = vadd.f32 %v334, %v366
    %v375 = vtanh.pop %v371
    %v376 = vtanh.pop %v372
    %v377 = vtanh.pop %v373
    %v378 = vtanh.pop %v374
    %v379 = vmul.f32 %v375, %v340
    %v380 = vmul.f32 %v376, %v342
    %v381 = vmul.f32 %v377, %v344
    %v382 = vmul.f32 %v378, %v346
    %383 = vset.pattern.permute.xlu0 2
    %384 = vperm.xlu0 %383, %v39
    %v385 = vpop.permute.xlu0 %384
    %387 = vset.pattern.permute.xlu0 2
    %388 = vperm.xlu0 %387, %v40
    %v389 = vpop.permute.xlu0 %388
    %391 = vset.pattern.permute.xlu0 2
    %392 = vperm.xlu0 %391, %v41
    %v393 = vpop.permute.xlu0 %392
    %395 = vset.pattern.permute.xlu0 2
    %396 = vperm.xlu0 %395, %v42
    %v397 = vpop.permute.xlu0 %396
    %v399 = vmul.f32 %v385, %v67
    %v400 = vmul.f32 %v389, %v67
    %v401 = vmul.f32 %v393, %v67
    %v402 = vmul.f32 %v397, %v67
    %v403 = vadd.f32 %v399, %v77
    %v404 = vadd.f32 %v400, %v77
    %v405 = vadd.f32 %v401, %v77
    %v406 = vadd.f32 %v402, %v77
    %v407 = vpack.c.bf16 %v380, %v379
    %v408 = vpack.c.bf16 %v382, %v381
    %411 = vrot.lane.b32.xlu0 %v407, 64
    %v412 = vpop.permute.xlu0 %411
    %413 = vrot.lane.b32.xlu0 %v408, 64
    %v414 = vpop.permute.xlu0 %413
    %v416 = vsel %vm95, %v412, 0
    %v419 = vsel %vm95, %v414, 0
    %421 = vmatprep.subr.bf16.mxu0 0
    %422 = vmatpush1.bf16.msra.mxu0 %v91
    %423 = vmatprep.subr.bf16.mxu0 0
    %424 = vmatpush1.bf16.msra.mxu0 %v92
    %425 = vmatprep.subr.bf16.mxu0 0
    %426 = vmatpush1.bf16.msra.mxu0 0
    %427 = vmatprep.subr.bf16.mxu0 0
    %428 = vmatpush1.bf16.msra.mxu0 0
    %429 = vmatprep.subr.bf16.mxu0 0
    %430 = vmatpush1.bf16.msra.mxu0 0
    %431 = vmatprep.subr.bf16.mxu0 0
    %432 = vmatpush1.bf16.msra.mxu0 0
    %433 = vmatprep.subr.bf16.mxu0 0
    %434 = vmatpush1.bf16.msra.mxu0 0
    %435 = vmatprep.subr.bf16.mxu0 0
    %436 = vmatpush1.bf16.msra.mxu0 0
    %437 = vmatprep.subr.bf16.mxu0 0
    %438 = vmatpush1.bf16.msra.mxu0 0
    %439 = vmatprep.subr.bf16.mxu0 0
    %440 = vmatpush1.bf16.msra.mxu0 0
    %441 = vmatprep.subr.bf16.mxu0 0
    %442 = vmatpush1.bf16.msra.mxu0 0
    %443 = vmatprep.subr.bf16.mxu0 0
    %444 = vmatpush1.bf16.msra.mxu0 0
    %445 = vmatprep.subr.bf16.mxu0 0
    %446 = vmatpush1.bf16.msra.mxu0 0
    %447 = vmatprep.subr.bf16.mxu0 0
    %448 = vmatpush1.bf16.msra.mxu0 0
    %449 = vmatprep.subr.bf16.mxu0 0
    %450 = vmatpush1.bf16.msra.mxu0 0
    %451 = vmatprep.subr.bf16.mxu0 0
    %452 = vmatpush1.bf16.msra.mxu0 0
    %453 = vmatprep.mubr.bf16.mxu0 0
    %454 = vmatmul.mubr.bf16.gmra.mrb[0].mxu0 %v416
    %v455 = vpop.f32.mrb[0].mxu0
    %v456 = vadd.f32 0.0, %v455
    %v457 = vpop.f32.mrb[0].mxu0
    %v458 = vpop.f32.mrb[0].mxu0
    %v459 = vadd.f32 0.0, %v458
    %v460 = vpop.f32.mrb[0].mxu0
    %461 = vmatprep.mubr.bf16.mxu0 0
    %462 = vmatmul.mubr.bf16.gmra.mrb[0].mxu0 %v419
    %v463 = vpop.f32.mrb[0].mxu0
    %v464 = vadd.f32 0.0, %v463
    %v465 = vpop.f32.mrb[0].mxu0
    %v466 = vpop.f32.mrb[0].mxu0
    %v467 = vadd.f32 0.0, %v466
    %v468 = vpop.f32.mrb[0].mxu0
    %469 = vdwg.mxu0
    %v470 = vadd.f32 %v403, %v456
    %v471 = vadd.f32 %v404, %v459
    %v472 = vadd.f32 %v405, %v464
    %v473 = vadd.f32 %v406, %v467
    %v474 = vtanh.pop %v470
    %v475 = vtanh.pop %v471
    %v476 = vtanh.pop %v472
    %v477 = vtanh.pop %v473
    %v478 = vmul.f32 %v474, %v160
    %v479 = vmul.f32 %v475, %v160
    %v480 = vmul.f32 %v476, %v160
    %v481 = vmul.f32 %v477, %v160
    %v482 = vadd.f32 %v478, %v170
    %v483 = vadd.f32 %v479, %v170
    %v484 = vadd.f32 %v480, %v170
    %v485 = vadd.f32 %v481, %v170
    %v486 = vmul.f32 %v371, %v482
    %v487 = vmul.f32 %v372, %v483
    %v488 = vmul.f32 %v373, %v484
    %v489 = vmul.f32 %v374, %v485
    %494 = vrot.lane.b32.xlu0 %v482, 96
    %v495 = vpop.permute.xlu0 %494
    %496 = vrot.lane.b32.xlu0 %v483, 96
    %v497 = vpop.permute.xlu0 %496
    %498 = vrot.lane.b32.xlu0 %v484, 96
    %v499 = vpop.permute.xlu0 %498
    %500 = vrot.lane.b32.xlu0 %v485, 96
    %v501 = vpop.permute.xlu0 %500
    %v506 = vmul.f32 %v482, %v495
    %v507 = vmul.f32 %v483, %v497
    %v508 = vmul.f32 %v484, %v499
    %v509 = vmul.f32 %v485, %v501
    %514 = vrot.lane.b32.xlu0 %v506, 64
    %v515 = vpop.permute.xlu0 %514
    %516 = vrot.lane.b32.xlu0 %v507, 64
    %v517 = vpop.permute.xlu0 %516
    %518 = vrot.lane.b32.xlu0 %v508, 64
    %v519 = vpop.permute.xlu0 %518
    %520 = vrot.lane.b32.xlu0 %v509, 64
    %v521 = vpop.permute.xlu0 %520
    %v526 = vadd.f32 %v486, %v515
    %v527 = vadd.f32 %v487, %v517
    %v528 = vadd.f32 %v488, %v519
    %v529 = vadd.f32 %v489, %v521
    %v530 = vtanh.pop %v526
    %v531 = vtanh.pop %v527
    %v532 = vtanh.pop %v528
    %v533 = vtanh.pop %v529
    %v534 = vmul.f32 %v530, %v495
    %v535 = vmul.f32 %v531, %v497
    %v536 = vmul.f32 %v532, %v499
    %v537 = vmul.f32 %v533, %v501
    %538 = vset.pattern.permute.xlu0 3
    %539 = vperm.xlu0 %538, %v39
    %v540 = vpop.permute.xlu0 %539
    %542 = vset.pattern.permute.xlu0 3
    %543 = vperm.xlu0 %542, %v40
    %v544 = vpop.permute.xlu0 %543
    %546 = vset.pattern.permute.xlu0 3
    %547 = vperm.xlu0 %546, %v41
    %v548 = vpop.permute.xlu0 %547
    %550 = vset.pattern.permute.xlu0 3
    %551 = vperm.xlu0 %550, %v42
    %v552 = vpop.permute.xlu0 %551
    %v554 = vmul.f32 %v540, %v67
    %v555 = vmul.f32 %v544, %v67
    %v556 = vmul.f32 %v548, %v67
    %v557 = vmul.f32 %v552, %v67
    %v558 = vadd.f32 %v554, %v77
    %v559 = vadd.f32 %v555, %v77
    %v560 = vadd.f32 %v556, %v77
    %v561 = vadd.f32 %v557, %v77
    %v562 = vpack.c.bf16 %v535, %v534
    %v563 = vpack.c.bf16 %v537, %v536
    %566 = vrot.lane.b32.xlu0 %v562, 64
    %v567 = vpop.permute.xlu0 %566
    %568 = vrot.lane.b32.xlu0 %v563, 64
    %v569 = vpop.permute.xlu0 %568
    %v571 = vsel %vm95, %v567, 0
    %v574 = vsel %vm95, %v569, 0
    %576 = vmatprep.subr.bf16.mxu0 0
    %577 = vmatpush1.bf16.msra.mxu0 %v91
    %578 = vmatprep.subr.bf16.mxu0 0
    %579 = vmatpush1.bf16.msra.mxu0 %v92
    %580 = vmatprep.subr.bf16.mxu0 0
    %581 = vmatpush1.bf16.msra.mxu0 0
    %582 = vmatprep.subr.bf16.mxu0 0
    %583 = vmatpush1.bf16.msra.mxu0 0
    %584 = vmatprep.subr.bf16.mxu0 0
    %585 = vmatpush1.bf16.msra.mxu0 0
    %586 = vmatprep.subr.bf16.mxu0 0
    %587 = vmatpush1.bf16.msra.mxu0 0
    %588 = vmatprep.subr.bf16.mxu0 0
    %589 = vmatpush1.bf16.msra.mxu0 0
    %590 = vmatprep.subr.bf16.mxu0 0
    %591 = vmatpush1.bf16.msra.mxu0 0
    %592 = vmatprep.subr.bf16.mxu0 0
    %593 = vmatpush1.bf16.msra.mxu0 0
    %594 = vmatprep.subr.bf16.mxu0 0
    %595 = vmatpush1.bf16.msra.mxu0 0
    %596 = vmatprep.subr.bf16.mxu0 0
    %597 = vmatpush1.bf16.msra.mxu0 0
    %598 = vmatprep.subr.bf16.mxu0 0
    %599 = vmatpush1.bf16.msra.mxu0 0
    %600 = vmatprep.subr.bf16.mxu0 0
    %601 = vmatpush1.bf16.msra.mxu0 0
    %602 = vmatprep.subr.bf16.mxu0 0
    %603 = vmatpush1.bf16.msra.mxu0 0
    %604 = vmatprep.subr.bf16.mxu0 0
    %605 = vmatpush1.bf16.msra.mxu0 0
    %606 = vmatprep.subr.bf16.mxu0 0
    %607 = vmatpush1.bf16.msra.mxu0 0
    %608 = vmatprep.mubr.bf16.mxu0 0
    %609 = vmatmul.mubr.bf16.gmra.mrb[0].mxu0 %v571
    %v610 = vpop.f32.mrb[0].mxu0
    %v611 = vadd.f32 0.0, %v610
    %v612 = vpop.f32.mrb[0].mxu0
    %v613 = vpop.f32.mrb[0].mxu0
    %v614 = vadd.f32 0.0, %v613
    %v615 = vpop.f32.mrb[0].mxu0
    %616 = vmatprep.mubr.bf16.mxu0 0
    %617 = vmatmul.mubr.bf16.gmra.mrb[0].mxu0 %v574
    %v618 = vpop.f32.mrb[0].mxu0
    %v619 = vadd.f32 0.0, %v618
    %v620 = vpop.f32.mrb[0].mxu0
    %v621 = vpop.f32.mrb[0].mxu0
    %v622 = vadd.f32 0.0, %v621
    %v623 = vpop.f32.mrb[0].mxu0
    %624 = vdwg.mxu0
    %v625 = vadd.f32 %v558, %v611
    %v626 = vadd.f32 %v559, %v614
    %v627 = vadd.f32 %v560, %v619
    %v628 = vadd.f32 %v561, %v622
    %v629 = vtanh.pop %v625
    %v630 = vtanh.pop %v626
    %v631 = vtanh.pop %v627
    %v632 = vtanh.pop %v628
    %v633 = vmul.f32 %v629, %v160
    %v634 = vmul.f32 %v630, %v160
    %v635 = vmul.f32 %v631, %v160
    %v636 = vmul.f32 %v632, %v160
    %v637 = vadd.f32 %v633, %v170
    %v638 = vadd.f32 %v634, %v170
    %v639 = vadd.f32 %v635, %v170
    %v640 = vadd.f32 %v636, %v170
    %v641 = vmul.f32 %v526, %v637
    %v642 = vmul.f32 %v527, %v638
    %v643 = vmul.f32 %v528, %v639
    %v644 = vmul.f32 %v529, %v640
    %649 = vrot.lane.b32.xlu0 %v637, 96
    %v650 = vpop.permute.xlu0 %649
    %651 = vrot.lane.b32.xlu0 %v638, 96
    %v652 = vpop.permute.xlu0 %651
    %653 = vrot.lane.b32.xlu0 %v639, 96
    %v654 = vpop.permute.xlu0 %653
    %655 = vrot.lane.b32.xlu0 %v640, 96
    %v656 = vpop.permute.xlu0 %655
    %v661 = vmul.f32 %v637, %v650
    %v662 = vmul.f32 %v638, %v652
    %v663 = vmul.f32 %v639, %v654
    %v664 = vmul.f32 %v640, %v656
    %669 = vrot.lane.b32.xlu0 %v661, 64
    %v670 = vpop.permute.xlu0 %669
    %671 = vrot.lane.b32.xlu0 %v662, 64
    %v672 = vpop.permute.xlu0 %671
    %673 = vrot.lane.b32.xlu0 %v663, 64
    %v674 = vpop.permute.xlu0 %673
    %675 = vrot.lane.b32.xlu0 %v664, 64
    %v676 = vpop.permute.xlu0 %675
    %v681 = vadd.f32 %v641, %v670
    %v682 = vadd.f32 %v642, %v672
    %v683 = vadd.f32 %v643, %v674
    %v684 = vadd.f32 %v644, %v676
    %v685 = vtanh.pop %v681
    %v686 = vtanh.pop %v682
    %v687 = vtanh.pop %v683
    %v688 = vtanh.pop %v684
    %v689 = vmul.f32 %v685, %v650
    %v690 = vmul.f32 %v686, %v652
    %v691 = vmul.f32 %v687, %v654
    %v692 = vmul.f32 %v688, %v656
    %693 = vset.pattern.permute.xlu0 4
    %694 = vperm.xlu0 %693, %v39
    %v695 = vpop.permute.xlu0 %694
    %697 = vset.pattern.permute.xlu0 4
    %698 = vperm.xlu0 %697, %v40
    %v699 = vpop.permute.xlu0 %698
    %701 = vset.pattern.permute.xlu0 4
    %702 = vperm.xlu0 %701, %v41
    %v703 = vpop.permute.xlu0 %702
    %705 = vset.pattern.permute.xlu0 4
    %706 = vperm.xlu0 %705, %v42
    %v707 = vpop.permute.xlu0 %706
    %v709 = vmul.f32 %v695, %v67
    %v710 = vmul.f32 %v699, %v67
    %v711 = vmul.f32 %v703, %v67
    %v712 = vmul.f32 %v707, %v67
    %v713 = vadd.f32 %v709, %v77
    %v714 = vadd.f32 %v710, %v77
    %v715 = vadd.f32 %v711, %v77
    %v716 = vadd.f32 %v712, %v77
    %v717 = vpack.c.bf16 %v690, %v689
    %v718 = vpack.c.bf16 %v692, %v691
    %721 = vrot.lane.b32.xlu0 %v717, 64
    %v722 = vpop.permute.xlu0 %721
    %723 = vrot.lane.b32.xlu0 %v718, 64
    %v724 = vpop.permute.xlu0 %723
    %v726 = vsel %vm95, %v722, 0
    %v729 = vsel %vm95, %v724, 0
    %731 = vmatprep.subr.bf16.mxu0 0
    %732 = vmatpush1.bf16.msra.mxu0 %v91
    %733 = vmatprep.subr.bf16.mxu0 0
    %734 = vmatpush1.bf16.msra.mxu0 %v92
    %735 = vmatprep.subr.bf16.mxu0 0
    %736 = vmatpush1.bf16.msra.mxu0 0
    %737 = vmatprep.subr.bf16.mxu0 0
    %738 = vmatpush1.bf16.msra.mxu0 0
    %739 = vmatprep.subr.bf16.mxu0 0
    %740 = vmatpush1.bf16.msra.mxu0 0
    %741 = vmatprep.subr.bf16.mxu0 0
    %742 = vmatpush1.bf16.msra.mxu0 0
    %743 = vmatprep.subr.bf16.mxu0 0
    %744 = vmatpush1.bf16.msra.mxu0 0
    %745 = vmatprep.subr.bf16.mxu0 0
    %746 = vmatpush1.bf16.msra.mxu0 0
    %747 = vmatprep.subr.bf16.mxu0 0
    %748 = vmatpush1.bf16.msra.mxu0 0
    %749 = vmatprep.subr.bf16.mxu0 0
    %750 = vmatpush1.bf16.msra.mxu0 0
    %751 = vmatprep.subr.bf16.mxu0 0
    %752 = vmatpush1.bf16.msra.mxu0 0
    %753 = vmatprep.subr.bf16.mxu0 0
    %754 = vmatpush1.bf16.msra.mxu0 0
    %755 = vmatprep.subr.bf16.mxu0 0
    %756 = vmatpush1.bf16.msra.mxu0 0
    %757 = vmatprep.subr.bf16.mxu0 0
    %758 = vmatpush1.bf16.msra.mxu0 0
    %759 = vmatprep.subr.bf16.mxu0 0
    %760 = vmatpush1.bf16.msra.mxu0 0
    %761 = vmatprep.subr.bf16.mxu0 0
    %762 = vmatpush1.bf16.msra.mxu0 0
    %763 = vmatprep.mubr.bf16.mxu0 0
    %764 = vmatmul.mubr.bf16.gmra.mrb[0].mxu0 %v726
    %v765 = vpop.f32.mrb[0].mxu0
    %v766 = vadd.f32 0.0, %v765
    %v767 = vpop.f32.mrb[0].mxu0
    %v768 = vpop.f32.mrb[0].mxu0
    %v769 = vadd.f32 0.0, %v768
    %v770 = vpop.f32.mrb[0].mxu0
    %771 = vmatprep.mubr.bf16.mxu0 0
    %772 = vmatmul.mubr.bf16.gmra.mrb[0].mxu0 %v729
    %v773 = vpop.f32.mrb[0].mxu0
    %v774 = vadd.f32 0.0, %v773
    %v775 = vpop.f32.mrb[0].mxu0
    %v776 = vpop.f32.mrb[0].mxu0
    %v777 = vadd.f32 0.0, %v776
    %v778 = vpop.f32.mrb[0].mxu0
    %779 = vdwg.mxu0
    %v780 = vadd.f32 %v713, %v766
    %v781 = vadd.f32 %v714, %v769
    %v782 = vadd.f32 %v715, %v774
    %v783 = vadd.f32 %v716, %v777
    %v784 = vtanh.pop %v780
    %v785 = vtanh.pop %v781
    %v786 = vtanh.pop %v782
    %v787 = vtanh.pop %v783
    %v788 = vmul.f32 %v784, %v160
    %v789 = vmul.f32 %v785, %v160
    %v790 = vmul.f32 %v786, %v160
    %v791 = vmul.f32 %v787, %v160
    %v792 = vadd.f32 %v788, %v170
    %v793 = vadd.f32 %v789, %v170
    %v794 = vadd.f32 %v790, %v170
    %v795 = vadd.f32 %v791, %v170
    %v796 = vmul.f32 %v681, %v792
    %v797 = vmul.f32 %v682, %v793
    %v798 = vmul.f32 %v683, %v794
    %v799 = vmul.f32 %v684, %v795
    %804 = vrot.lane.b32.xlu0 %v792, 96
    %v805 = vpop.permute.xlu0 %804
    %806 = vrot.lane.b32.xlu0 %v793, 96
    %v807 = vpop.permute.xlu0 %806
    %808 = vrot.lane.b32.xlu0 %v794, 96
    %v809 = vpop.permute.xlu0 %808
    %810 = vrot.lane.b32.xlu0 %v795, 96
    %v811 = vpop.permute.xlu0 %810
    %v816 = vmul.f32 %v792, %v805
    %v817 = vmul.f32 %v793, %v807
    %v818 = vmul.f32 %v794, %v809
    %v819 = vmul.f32 %v795, %v811
    %824 = vrot.lane.b32.xlu0 %v816, 64
    %v825 = vpop.permute.xlu0 %824
    %826 = vrot.lane.b32.xlu0 %v817, 64
    %v827 = vpop.permute.xlu0 %826
    %828 = vrot.lane.b32.xlu0 %v818, 64
    %v829 = vpop.permute.xlu0 %828
    %830 = vrot.lane.b32.xlu0 %v819, 64
    %v831 = vpop.permute.xlu0 %830
    %v836 = vadd.f32 %v796, %v825
    %v837 = vadd.f32 %v797, %v827
    %v838 = vadd.f32 %v798, %v829
    %v839 = vadd.f32 %v799, %v831
    %v840 = vtanh.pop %v836
    %v841 = vtanh.pop %v837
    %v842 = vtanh.pop %v838
    %v843 = vtanh.pop %v839
    %v844 = vmul.f32 %v840, %v805
    %v845 = vmul.f32 %v841, %v807
    %v846 = vmul.f32 %v842, %v809
    %v847 = vmul.f32 %v843, %v811
    %848 = vset.pattern.permute.xlu0 5
    %849 = vperm.xlu0 %848, %v39
    %v850 = vpop.permute.xlu0 %849
    %852 = vset.pattern.permute.xlu0 5
    %853 = vperm.xlu0 %852, %v40
    %v854 = vpop.permute.xlu0 %853
    %856 = vset.pattern.permute.xlu0 5
    %857 = vperm.xlu0 %856, %v41
    %v858 = vpop.permute.xlu0 %857
    %860 = vset.pattern.permute.xlu0 5
    %861 = vperm.xlu0 %860, %v42
    %v862 = vpop.permute.xlu0 %861
    %v864 = vmul.f32 %v850, %v67
    %v865 = vmul.f32 %v854, %v67
    %v866 = vmul.f32 %v858, %v67
    %v867 = vmul.f32 %v862, %v67
    %v868 = vadd.f32 %v864, %v77
    %v869 = vadd.f32 %v865, %v77
    %v870 = vadd.f32 %v866, %v77
    %v871 = vadd.f32 %v867, %v77
    %v872 = vpack.c.bf16 %v845, %v844
    %v873 = vpack.c.bf16 %v847, %v846
    %876 = vrot.lane.b32.xlu0 %v872, 64
    %v877 = vpop.permute.xlu0 %876
    %878 = vrot.lane.b32.xlu0 %v873, 64
    %v879 = vpop.permute.xlu0 %878
    %v881 = vsel %vm95, %v877, 0
    %v884 = vsel %vm95, %v879, 0
    %886 = vmatprep.subr.bf16.mxu0 0
    %887 = vmatpush1.bf16.msra.mxu0 %v91
    %888 = vmatprep.subr.bf16.mxu0 0
    %889 = vmatpush1.bf16.msra.mxu0 %v92
    %890 = vmatprep.subr.bf16.mxu0 0
    %891 = vmatpush1.bf16.msra.mxu0 0
    %892 = vmatprep.subr.bf16.mxu0 0
    %893 = vmatpush1.bf16.msra.mxu0 0
    %894 = vmatprep.subr.bf16.mxu0 0
    %895 = vmatpush1.bf16.msra.mxu0 0
    %896 = vmatprep.subr.bf16.mxu0 0
    %897 = vmatpush1.bf16.msra.mxu0 0
    %898 = vmatprep.subr.bf16.mxu0 0
    %899 = vmatpush1.bf16.msra.mxu0 0
    %900 = vmatprep.subr.bf16.mxu0 0
    %901 = vmatpush1.bf16.msra.mxu0 0
    %902 = vmatprep.subr.bf16.mxu0 0
    %903 = vmatpush1.bf16.msra.mxu0 0
    %904 = vmatprep.subr.bf16.mxu0 0
    %905 = vmatpush1.bf16.msra.mxu0 0
    %906 = vmatprep.subr.bf16.mxu0 0
    %907 = vmatpush1.bf16.msra.mxu0 0
    %908 = vmatprep.subr.bf16.mxu0 0
    %909 = vmatpush1.bf16.msra.mxu0 0
    %910 = vmatprep.subr.bf16.mxu0 0
    %911 = vmatpush1.bf16.msra.mxu0 0
    %912 = vmatprep.subr.bf16.mxu0 0
    %913 = vmatpush1.bf16.msra.mxu0 0
    %914 = vmatprep.subr.bf16.mxu0 0
    %915 = vmatpush1.bf16.msra.mxu0 0
    %916 = vmatprep.subr.bf16.mxu0 0
    %917 = vmatpush1.bf16.msra.mxu0 0
    %918 = vmatprep.mubr.bf16.mxu0 0
    %919 = vmatmul.mubr.bf16.gmra.mrb[0].mxu0 %v881
    %v920 = vpop.f32.mrb[0].mxu0
    %v921 = vadd.f32 0.0, %v920
    %v922 = vpop.f32.mrb[0].mxu0
    %v923 = vpop.f32.mrb[0].mxu0
    %v924 = vadd.f32 0.0, %v923
    %v925 = vpop.f32.mrb[0].mxu0
    %926 = vmatprep.mubr.bf16.mxu0 0
    %927 = vmatmul.mubr.bf16.gmra.mrb[0].mxu0 %v884
    %v928 = vpop.f32.mrb[0].mxu0
    %v929 = vadd.f32 0.0, %v928
    %v930 = vpop.f32.mrb[0].mxu0
    %v931 = vpop.f32.mrb[0].mxu0
    %v932 = vadd.f32 0.0, %v931
    %v933 = vpop.f32.mrb[0].mxu0
    %934 = vdwg.mxu0
    %v935 = vadd.f32 %v868, %v921
    %v936 = vadd.f32 %v869, %v924
    %v937 = vadd.f32 %v870, %v929
    %v938 = vadd.f32 %v871, %v932
    %v939 = vtanh.pop %v935
    %v940 = vtanh.pop %v936
    %v941 = vtanh.pop %v937
    %v942 = vtanh.pop %v938
    %v943 = vmul.f32 %v939, %v160
    %v944 = vmul.f32 %v940, %v160
    %v945 = vmul.f32 %v941, %v160
    %v946 = vmul.f32 %v942, %v160
    %v947 = vadd.f32 %v943, %v170
    %v948 = vadd.f32 %v944, %v170
    %v949 = vadd.f32 %v945, %v170
    %v950 = vadd.f32 %v946, %v170
    %v951 = vmul.f32 %v836, %v947
    %v952 = vmul.f32 %v837, %v948
    %v953 = vmul.f32 %v838, %v949
    %v954 = vmul.f32 %v839, %v950
    %959 = vrot.lane.b32.xlu0 %v947, 96
    %v960 = vpop.permute.xlu0 %959
    %961 = vrot.lane.b32.xlu0 %v948, 96
    %v962 = vpop.permute.xlu0 %961
    %963 = vrot.lane.b32.xlu0 %v949, 96
    %v964 = vpop.permute.xlu0 %963
    %965 = vrot.lane.b32.xlu0 %v950, 96
    %v966 = vpop.permute.xlu0 %965
    %v971 = vmul.f32 %v947, %v960
    %v972 = vmul.f32 %v948, %v962
    %v973 = vmul.f32 %v949, %v964
    %v974 = vmul.f32 %v950, %v966
    %979 = vrot.lane.b32.xlu0 %v971, 64
    %v980 = vpop.permute.xlu0 %979
    %981 = vrot.lane.b32.xlu0 %v972, 64
    %v982 = vpop.permute.xlu0 %981
    %983 = vrot.lane.b32.xlu0 %v973, 64
    %v984 = vpop.permute.xlu0 %983
    %985 = vrot.lane.b32.xlu0 %v974, 64
    %v986 = vpop.permute.xlu0 %985
    %v991 = vadd.f32 %v951, %v980
    %v992 = vadd.f32 %v952, %v982
    %v993 = vadd.f32 %v953, %v984
    %v994 = vadd.f32 %v954, %v986
    %v995 = vtanh.pop %v991
    %v996 = vtanh.pop %v992
    %v997 = vtanh.pop %v993
    %v998 = vtanh.pop %v994
    %v999 = vmul.f32 %v995, %v960
    %v1000 = vmul.f32 %v996, %v962
    %v1001 = vmul.f32 %v997, %v964
    %v1002 = vmul.f32 %v998, %v966
    %1003 = vset.pattern.permute.xlu0 6
    %1004 = vperm.xlu0 %1003, %v39
    %v1005 = vpop.permute.xlu0 %1004
    %1007 = vset.pattern.permute.xlu0 6
    %1008 = vperm.xlu0 %1007, %v40
    %v1009 = vpop.permute.xlu0 %1008
    %1011 = vset.pattern.permute.xlu0 6
    %1012 = vperm.xlu0 %1011, %v41
    %v1013 = vpop.permute.xlu0 %1012
    %1015 = vset.pattern.permute.xlu0 6
    %1016 = vperm.xlu0 %1015, %v42
    %v1017 = vpop.permute.xlu0 %1016
    %v1019 = vmul.f32 %v1005, %v67
    %v1020 = vmul.f32 %v1009, %v67
    %v1021 = vmul.f32 %v1013, %v67
    %v1022 = vmul.f32 %v1017, %v67
    %v1023 = vadd.f32 %v1019, %v77
    %v1024 = vadd.f32 %v1020, %v77
    %v1025 = vadd.f32 %v1021, %v77
    %v1026 = vadd.f32 %v1022, %v77
    %v1027 = vpack.c.bf16 %v1000, %v999
    %v1028 = vpack.c.bf16 %v1002, %v1001
    %1031 = vrot.lane.b32.xlu0 %v1027, 64
    %v1032 = vpop.permute.xlu0 %1031
    %1033 = vrot.lane.b32.xlu0 %v1028, 64
    %v1034 = vpop.permute.xlu0 %1033
    %v1036 = vsel %vm95, %v1032, 0
    %v1039 = vsel %vm95, %v1034, 0
    %1041 = vmatprep.subr.bf16.mxu0 0
    %1042 = vmatpush1.bf16.msra.mxu0 %v91
    %1043 = vmatprep.subr.bf16.mxu0 0
    %1044 = vmatpush1.bf16.msra.mxu0 %v92
    %1045 = vmatprep.subr.bf16.mxu0 0
    %1046 = vmatpush1.bf16.msra.mxu0 0
    %1047 = vmatprep.subr.bf16.mxu0 0
    %1048 = vmatpush1.bf16.msra.mxu0 0
    %1049 = vmatprep.subr.bf16.mxu0 0
    %1050 = vmatpush1.bf16.msra.mxu0 0
    %1051 = vmatprep.subr.bf16.mxu0 0
    %1052 = vmatpush1.bf16.msra.mxu0 0
    %1053 = vmatprep.subr.bf16.mxu0 0
    %1054 = vmatpush1.bf16.msra.mxu0 0
    %1055 = vmatprep.subr.bf16.mxu0 0
    %1056 = vmatpush1.bf16.msra.mxu0 0
    %1057 = vmatprep.subr.bf16.mxu0 0
    %1058 = vmatpush1.bf16.msra.mxu0 0
    %1059 = vmatprep.subr.bf16.mxu0 0
    %1060 = vmatpush1.bf16.msra.mxu0 0
    %1061 = vmatprep.subr.bf16.mxu0 0
    %1062 = vmatpush1.bf16.msra.mxu0 0
    %1063 = vmatprep.subr.bf16.mxu0 0
    %1064 = vmatpush1.bf16.msra.mxu0 0
    %1065 = vmatprep.subr.bf16.mxu0 0
    %1066 = vmatpush1.bf16.msra.mxu0 0
    %1067 = vmatprep.subr.bf16.mxu0 0
    %1068 = vmatpush1.bf16.msra.mxu0 0
    %1069 = vmatprep.subr.bf16.mxu0 0
    %1070 = vmatpush1.bf16.msra.mxu0 0
    %1071 = vmatprep.subr.bf16.mxu0 0
    %1072 = vmatpush1.bf16.msra.mxu0 0
    %1073 = vmatprep.mubr.bf16.mxu0 0
    %1074 = vmatmul.mubr.bf16.gmra.mrb[0].mxu0 %v1036
    %v1075 = vpop.f32.mrb[0].mxu0
    %v1076 = vadd.f32 0.0, %v1075
    %v1077 = vpop.f32.mrb[0].mxu0
    %v1078 = vpop.f32.mrb[0].mxu0
    %v1079 = vadd.f32 0.0, %v1078
    %v1080 = vpop.f32.mrb[0].mxu0
    %1081 = vmatprep.mubr.bf16.mxu0 0
    %1082 = vmatmul.mubr.bf16.gmra.mrb[0].mxu0 %v1039
    %v1083 = vpop.f32.mrb[0].mxu0
    %v1084 = vadd.f32 0.0, %v1083
    %v1085 = vpop.f32.mrb[0].mxu0
    %v1086 = vpop.f32.mrb[0].mxu0
    %v1087 = vadd.f32 0.0, %v1086
    %v1088 = vpop.f32.mrb[0].mxu0
    %1089 = vdwg.mxu0
    %v1090 = vadd.f32 %v1023, %v1076
    %v1091 = vadd.f32 %v1024, %v1079
    %v1092 = vadd.f32 %v1025, %v1084
    %v1093 = vadd.f32 %v1026, %v1087
    %v1094 = vtanh.pop %v1090
    %v1095 = vtanh.pop %v1091
    %v1096 = vtanh.pop %v1092
    %v1097 = vtanh.pop %v1093
    %v1098 = vmul.f32 %v1094, %v160
    %v1099 = vmul.f32 %v1095, %v160
    %v1100 = vmul.f32 %v1096, %v160
    %v1101 = vmul.f32 %v1097, %v160
    %v1102 = vadd.f32 %v1098, %v170
    %v1103 = vadd.f32 %v1099, %v170
    %v1104 = vadd.f32 %v1100, %v170
    %v1105 = vadd.f32 %v1101, %v170
    %v1106 = vmul.f32 %v991, %v1102
    %v1107 = vmul.f32 %v992, %v1103
    %v1108 = vmul.f32 %v993, %v1104
    %v1109 = vmul.f32 %v994, %v1105
    %1114 = vrot.lane.b32.xlu0 %v1102, 96
    %v1115 = vpop.permute.xlu0 %1114
    %1116 = vrot.lane.b32.xlu0 %v1103, 96
    %v1117 = vpop.permute.xlu0 %1116
    %1118 = vrot.lane.b32.xlu0 %v1104, 96
    %v1119 = vpop.permute.xlu0 %1118
    %1120 = vrot.lane.b32.xlu0 %v1105, 96
    %v1121 = vpop.permute.xlu0 %1120
    %v1126 = vmul.f32 %v1102, %v1115
    %v1127 = vmul.f32 %v1103, %v1117
    %v1128 = vmul.f32 %v1104, %v1119
    %v1129 = vmul.f32 %v1105, %v1121
    %1134 = vrot.lane.b32.xlu0 %v1126, 64
    %v1135 = vpop.permute.xlu0 %1134
    %1136 = vrot.lane.b32.xlu0 %v1127, 64
    %v1137 = vpop.permute.xlu0 %1136
    %1138 = vrot.lane.b32.xlu0 %v1128, 64
    %v1139 = vpop.permute.xlu0 %1138
    %1140 = vrot.lane.b32.xlu0 %v1129, 64
    %v1141 = vpop.permute.xlu0 %1140
    %v1146 = vadd.f32 %v1106, %v1135
    %v1147 = vadd.f32 %v1107, %v1137
    %v1148 = vadd.f32 %v1108, %v1139
    %v1149 = vadd.f32 %v1109, %v1141
    %v1150 = vtanh.pop %v1146
    %v1151 = vtanh.pop %v1147
    %v1152 = vtanh.pop %v1148
    %v1153 = vtanh.pop %v1149
    %v1154 = vmul.f32 %v1150, %v1115
    %v1155 = vmul.f32 %v1151, %v1117
    %v1156 = vmul.f32 %v1152, %v1119
    %v1157 = vmul.f32 %v1153, %v1121
    %1158 = vset.pattern.permute.xlu0 7
    %1159 = vperm.xlu0 %1158, %v39
    %v1160 = vpop.permute.xlu0 %1159
    %1162 = vset.pattern.permute.xlu0 7
    %1163 = vperm.xlu0 %1162, %v40
    %v1164 = vpop.permute.xlu0 %1163
    %1166 = vset.pattern.permute.xlu0 7
    %1167 = vperm.xlu0 %1166, %v41
    %v1168 = vpop.permute.xlu0 %1167
    %1170 = vset.pattern.permute.xlu0 7
    %1171 = vperm.xlu0 %1170, %v42
    %v1172 = vpop.permute.xlu0 %1171
    %v1174 = vmul.f32 %v1160, %v67
    %v1175 = vmul.f32 %v1164, %v67
    %v1176 = vmul.f32 %v1168, %v67
    %v1177 = vmul.f32 %v1172, %v67
    %v1178 = vadd.f32 %v1174, %v77
    %v1179 = vadd.f32 %v1175, %v77
    %v1180 = vadd.f32 %v1176, %v77
    %v1181 = vadd.f32 %v1177, %v77
    %v1182 = vpack.c.bf16 %v1155, %v1154
    %v1183 = vpack.c.bf16 %v1157, %v1156
    %1186 = vrot.lane.b32.xlu0 %v1182, 64
    %v1187 = vpop.permute.xlu0 %1186
    %1188 = vrot.lane.b32.xlu0 %v1183, 64
    %v1189 = vpop.permute.xlu0 %1188
    %v1191 = vsel %vm95, %v1187, 0
    %v1194 = vsel %vm95, %v1189, 0
    %1196 = vmatprep.subr.bf16.mxu0 0
    %1197 = vmatpush1.bf16.msra.mxu0 %v91
    %1198 = vmatprep.subr.bf16.mxu0 0
    %1199 = vmatpush1.bf16.msra.mxu0 %v92
    %1200 = vmatprep.subr.bf16.mxu0 0
    %1201 = vmatpush1.bf16.msra.mxu0 0
    %1202 = vmatprep.subr.bf16.mxu0 0
    %1203 = vmatpush1.bf16.msra.mxu0 0
    %1204 = vmatprep.subr.bf16.mxu0 0
    %1205 = vmatpush1.bf16.msra.mxu0 0
    %1206 = vmatprep.subr.bf16.mxu0 0
    %1207 = vmatpush1.bf16.msra.mxu0 0
    %1208 = vmatprep.subr.bf16.mxu0 0
    %1209 = vmatpush1.bf16.msra.mxu0 0
    %1210 = vmatprep.subr.bf16.mxu0 0
    %1211 = vmatpush1.bf16.msra.mxu0 0
    %1212 = vmatprep.subr.bf16.mxu0 0
    %1213 = vmatpush1.bf16.msra.mxu0 0
    %1214 = vmatprep.subr.bf16.mxu0 0
    %1215 = vmatpush1.bf16.msra.mxu0 0
    %1216 = vmatprep.subr.bf16.mxu0 0
    %1217 = vmatpush1.bf16.msra.mxu0 0
    %1218 = vmatprep.subr.bf16.mxu0 0
    %1219 = vmatpush1.bf16.msra.mxu0 0
    %1220 = vmatprep.subr.bf16.mxu0 0
    %1221 = vmatpush1.bf16.msra.mxu0 0
    %1222 = vmatprep.subr.bf16.mxu0 0
    %1223 = vmatpush1.bf16.msra.mxu0 0
    %1224 = vmatprep.subr.bf16.mxu0 0
    %1225 = vmatpush1.bf16.msra.mxu0 0
    %1226 = vmatprep.subr.bf16.mxu0 0
    %1227 = vmatpush1.bf16.msra.mxu0 0
    %1228 = vmatprep.mubr.bf16.mxu0 0
    %1229 = vmatmul.mubr.bf16.gmra.mrb[0].mxu0 %v1191
    %v1230 = vpop.f32.mrb[0].mxu0
    %v1231 = vadd.f32 0.0, %v1230
    %v1232 = vpop.f32.mrb[0].mxu0
    %v1233 = vpop.f32.mrb[0].mxu0
    %v1234 = vadd.f32 0.0, %v1233
    %v1235 = vpop.f32.mrb[0].mxu0
    %1236 = vmatprep.mubr.bf16.mxu0 0
    %1237 = vmatmul.mubr.bf16.gmra.mrb[0].mxu0 %v1194
    %v1238 = vpop.f32.mrb[0].mxu0
    %v1239 = vadd.f32 0.0, %v1238
    %v1240 = vpop.f32.mrb[0].mxu0
    %v1241 = vpop.f32.mrb[0].mxu0
    %v1242 = vadd.f32 0.0, %v1241
    %v1243 = vpop.f32.mrb[0].mxu0
    %1244 = vdwg.mxu0
    %v1245 = vadd.f32 %v1178, %v1231
    %v1246 = vadd.f32 %v1179, %v1234
    %v1247 = vadd.f32 %v1180, %v1239
    %v1248 = vadd.f32 %v1181, %v1242
    %v1249 = vtanh.pop %v1245
    %v1250 = vtanh.pop %v1246
    %v1251 = vtanh.pop %v1247
    %v1252 = vtanh.pop %v1248
    %v1253 = vmul.f32 %v1249, %v160
    %v1254 = vmul.f32 %v1250, %v160
    %v1255 = vmul.f32 %v1251, %v160
    %v1256 = vmul.f32 %v1252, %v160
    %v1257 = vadd.f32 %v1253, %v170
    %v1258 = vadd.f32 %v1254, %v170
    %v1259 = vadd.f32 %v1255, %v170
    %v1260 = vadd.f32 %v1256, %v170
    %v1261 = vmul.f32 %v1146, %v1257
    %v1262 = vmul.f32 %v1147, %v1258
    %v1263 = vmul.f32 %v1148, %v1259
    %v1264 = vmul.f32 %v1149, %v1260
    %1269 = vrot.lane.b32.xlu0 %v1257, 96
    %v1270 = vpop.permute.xlu0 %1269
    %1271 = vrot.lane.b32.xlu0 %v1258, 96
    %v1272 = vpop.permute.xlu0 %1271
    %1273 = vrot.lane.b32.xlu0 %v1259, 96
    %v1274 = vpop.permute.xlu0 %1273
    %1275 = vrot.lane.b32.xlu0 %v1260, 96
    %v1276 = vpop.permute.xlu0 %1275
    %v1281 = vmul.f32 %v1257, %v1270
    %v1282 = vmul.f32 %v1258, %v1272
    %v1283 = vmul.f32 %v1259, %v1274
    %v1284 = vmul.f32 %v1260, %v1276
    %1289 = vrot.lane.b32.xlu0 %v1281, 64
    %v1290 = vpop.permute.xlu0 %1289
    %1291 = vrot.lane.b32.xlu0 %v1282, 64
    %v1292 = vpop.permute.xlu0 %1291
    %1293 = vrot.lane.b32.xlu0 %v1283, 64
    %v1294 = vpop.permute.xlu0 %1293
    %1295 = vrot.lane.b32.xlu0 %v1284, 64
    %v1296 = vpop.permute.xlu0 %1295
    %v1301 = vadd.f32 %v1261, %v1290
    %v1302 = vadd.f32 %v1262, %v1292
    %v1303 = vadd.f32 %v1263, %v1294
    %v1304 = vadd.f32 %v1264, %v1296
    %v1305 = vtanh.pop %v1301
    %v1306 = vtanh.pop %v1302
    %v1307 = vtanh.pop %v1303
    %v1308 = vtanh.pop %v1304
    %v1309 = vmul.f32 %v1305, %v1270
    %v1310 = vmul.f32 %v1306, %v1272
    %v1311 = vmul.f32 %v1307, %v1274
    %v1312 = vmul.f32 %v1308, %v1276
    %v1313 = vld [vmem:[%s6] sm:$0xff]
    %v1314 = vld [vmem:[%s6 + $0x8] sm:$0xff]
    %v1315 = vld [vmem:[%s6 + $0x10] sm:$0xff]
    %v1316 = vld [vmem:[%s6 + $0x18] sm:$0xff]
    %v1317 = vld [vmem:[%s7] sm:$0x1]
    %v1319 = vlaneseq
    %v1320 = vshrl.u32 %v1319, 7
    %v1321 = vsub.s32 0, %v1320
    %v1322 = vrot.slane %v1317, %v1321
    %1328 = vrot.lane.b32.xlu0 %v1309, 64
    %v1329 = vpop.permute.xlu0 %1328
    %1330 = vrot.lane.b32.xlu0 %v1310, 64
    %v1331 = vpop.permute.xlu0 %1330
    %1332 = vrot.lane.b32.xlu0 %v1311, 64
    %v1333 = vpop.permute.xlu0 %1332
    %1334 = vrot.lane.b32.xlu0 %v1312, 64
    %v1335 = vpop.permute.xlu0 %1334
    %v1336 = vsel %vm95, %v1329, 0
    %v1338 = vsel %vm95, %v1331, 0
    %v1340 = vsel %vm95, %v1333, 0
    %v1342 = vsel %vm95, %v1335, 0
    %1344 = vmatprep.subr.mxu0 0.0
    %1345 = vmatpush1.msra.mxu0 %v1313
    %1346 = vmatprep.subr.mxu0 0.0
    %1347 = vmatpush1.msra.mxu0 %v1314
    %1348 = vmatprep.subr.mxu0 0.0
    %1349 = vmatpush1.msra.mxu0 %v1315
    %1350 = vmatprep.subr.mxu0 0.0
    %1351 = vmatpush1.msra.mxu0 %v1316
    %1352 = vmatprep.subr.mxu0 0.0
    %1353 = vmatpush1.msra.mxu0 0.0
    %1354 = vmatprep.subr.mxu0 0.0
    %1355 = vmatpush1.msra.mxu0 0.0
    %1356 = vmatprep.subr.mxu0 0.0
    %1357 = vmatpush1.msra.mxu0 0.0
    %1358 = vmatprep.subr.mxu0 0.0
    %1359 = vmatpush1.msra.mxu0 0.0
    %1360 = vmatprep.subr.mxu0 0.0
    %1361 = vmatpush1.msra.mxu0 0.0
    %1362 = vmatprep.subr.mxu0 0.0
    %1363 = vmatpush1.msra.mxu0 0.0
    %1364 = vmatprep.subr.mxu0 0.0
    %1365 = vmatpush1.msra.mxu0 0.0
    %1366 = vmatprep.subr.mxu0 0.0
    %1367 = vmatpush1.msra.mxu0 0.0
    %1368 = vmatprep.subr.mxu0 0.0
    %1369 = vmatpush1.msra.mxu0 0.0
    %1370 = vmatprep.subr.mxu0 0.0
    %1371 = vmatpush1.msra.mxu0 0.0
    %1372 = vmatprep.subr.mxu0 0.0
    %1373 = vmatpush1.msra.mxu0 0.0
    %1374 = vmatprep.subr.mxu0 0.0
    %1375 = vmatpush1.msra.mxu0 0.0
    %1376 = vmatprep.subr.mxu0 0.0
    %1377 = vmatpush1.msra.mxu0 0.0
    %1378 = vmatprep.subr.mxu0 0.0
    %1379 = vmatpush1.msra.mxu0 0.0
    %1380 = vmatprep.subr.mxu0 0.0
    %1381 = vmatpush1.msra.mxu0 0.0
    %1382 = vmatprep.subr.mxu0 0.0
    %1383 = vmatpush1.msra.mxu0 0.0
    %1384 = vmatprep.subr.mxu0 0.0
    %1385 = vmatpush1.msra.mxu0 0.0
    %1386 = vmatprep.subr.mxu0 0.0
    %1387 = vmatpush1.msra.mxu0 0.0
    %1388 = vmatprep.subr.mxu0 0.0
    %1389 = vmatpush1.msra.mxu0 0.0
    %1390 = vmatprep.subr.mxu0 0.0
    %1391 = vmatpush1.msra.mxu0 0.0
    %1392 = vmatprep.subr.mxu0 0.0
    %1393 = vmatpush1.msra.mxu0 0.0
    %1394 = vmatprep.subr.mxu0 0.0
    %1395 = vmatpush1.msra.mxu0 0.0
    %1396 = vmatprep.subr.mxu0 0.0
    %1397 = vmatpush1.msra.mxu0 0.0
    %1398 = vmatprep.subr.mxu0 0.0
    %1399 = vmatpush1.msra.mxu0 0.0
    %1400 = vmatprep.subr.mxu0 0.0
    %1401 = vmatpush1.msra.mxu0 0.0
    %1402 = vmatprep.subr.mxu0 0.0
    %1403 = vmatpush1.msra.mxu0 0.0
    %1404 = vmatprep.subr.mxu0 0.0
    %1405 = vmatpush1.msra.mxu0 0.0
    %1406 = vmatprep.subr.mxu0 0.0
    %1407 = vmatpush1.msra.mxu0 0.0
    %1408 = vmatprep.mubr.f32.mxu0 0.0
    %1409 = vmatmul.mubr.f32.gmra.mrb[0].mxu0 %v1336
    %v1410 = vpop.f32.mrb[0].mxu0
    %v1411 = vadd.f32 %v1322, %v1410
    %v1412 = vpop.f32.mrb[0].mxu0
    %1413 = vmatprep.mubr.f32.mxu0 0.0
    %1414 = vmatmul.mubr.f32.gmra.mrb[0].mxu0 %v1338
    %v1415 = vpop.f32.mrb[0].mxu0
    %v1416 = vadd.f32 %v1322, %v1415
    %v1417 = vpop.f32.mrb[0].mxu0
    %1418 = vmatprep.mubr.f32.mxu0 0.0
    %1419 = vmatmul.mubr.f32.gmra.mrb[0].mxu0 %v1340
    %v1420 = vpop.f32.mrb[0].mxu0
    %v1421 = vadd.f32 %v1322, %v1420
    %v1422 = vpop.f32.mrb[0].mxu0
    %1423 = vmatprep.mubr.f32.mxu0 0.0
    %1424 = vmatmul.mubr.f32.gmra.mrb[0].mxu0 %v1342
    %v1425 = vpop.f32.mrb[0].mxu0
    %v1426 = vadd.f32 %v1322, %v1425
    %v1427 = vpop.f32.mrb[0].mxu0
    %1428 = vdwg.mxu0
    %1429 = vmax.xlane.f32.xlu0 %v1411
    %v1430 = vpop.xlane.xlu0 %1429
    %1431 = vmax.xlane.f32.xlu0 %v1416
    %v1432 = vpop.xlane.xlu0 %1431
    %1433 = vmax.xlane.f32.xlu0 %v1421
    %v1434 = vpop.xlane.xlu0 %1433
    %1435 = vmax.xlane.f32.xlu0 %v1426
    %v1436 = vpop.xlane.xlu0 %1435
    %v1437 = vsub.f32 %v1411, %v1430
    %v1438 = vsub.f32 %v1416, %v1432
    %v1439 = vsub.f32 %v1421, %v1434
    %v1440 = vsub.f32 %v1426, %v1436
    %v1441 = vmul.f32 %v1437, 1.442695
    %v1442 = vpow.pop %v1441
    %v1443 = vmul.f32 %v1438, 1.442695
    %v1444 = vpow.pop %v1443
    %v1445 = vmul.f32 %v1439, 1.442695
    %v1446 = vpow.pop %v1445
    %v1447 = vmul.f32 %v1440, 1.442695
    %v1448 = vpow.pop %v1447
    %1449 = vadd.xlane.f32.xlu0 %v1442
    %v1450 = vpop.xlane.xlu0 %1449
    %1451 = vadd.xlane.f32.xlu0 %v1444
    %v1452 = vpop.xlane.xlu0 %1451
    %1453 = vadd.xlane.f32.xlu0 %v1446
    %v1454 = vpop.xlane.xlu0 %1453
    %1455 = vadd.xlane.f32.xlu0 %v1448
    %v1456 = vpop.xlane.xlu0 %1455
    %v1457 = vrcp.pop %v1450
    %v1458 = vmul.f32 %v1442, %v1457
    %v1459 = vrcp.pop %v1452
    %v1460 = vmul.f32 %v1444, %v1459
    %v1461 = vrcp.pop %v1454
    %v1462 = vmul.f32 %v1446, %v1461
    %v1463 = vrcp.pop %v1456
    %v1464 = vmul.f32 %v1448, %v1463
    %1465 = vst [vmem:[#allocation2] sm:$0xff] %v1458
    %1466 = vst [vmem:[#allocation2 + $0x8] sm:$0xff] %v1460
    %1467 = vst [vmem:[#allocation2 + $0x10] sm:$0xff] %v1462
    %1468 = vst [vmem:[#allocation2 + $0x18] sm:$0xff] %v1464
    // Predicated region
    $region34: #{tpu_custom_call.1} parent=1 // pred_check
      _
    $region35: #{tpu_custom_call.1} parent=1 // pred_check_branch
      %1470 = sbr.rel (0) target = $region37
    $region36: #{tpu_custom_call.1} parent=1 // pred_region
      %s1472 = ssub.s32 512, 512
      %1473 = vsyncadd [#allocation3], %s1472
      %s1474 = sshll.u32 [#allocation2], 4
      %s1475 = int_to_ptr.vmem [resolvable:$true] %s1474
      %1480 = dma.vmem_to_hbm [thread:$0]  %s1475, 512, %s8, [#allocation3], 128, 128, 8
    $region37: #{tpu_custom_call.1} parent=1 // pred_fallthru
      _
    // Predicated region
    $region38: #{tpu_custom_call.1} parent=1 // pred_check
      _
    $region39: #{tpu_custom_call.1} parent=1 // pred_check_branch
      %1482 = sbr.rel (0) target = $region41
    $region40: #{tpu_custom_call.1} parent=1 // pred_region
      %1483 = dma.done [#allocation3], 512
    $region41: #{tpu_custom_call.1} parent=1 // pred_fallthru
      _
    %1484 = vsyncpa [#allocation3], 1

</llo_original>
